<compile_context>
chip_gen: v6e
topology: v6e:2x2x1
jax: 0.10.0
libtpu: 0.0.40
codegen_flags: <defaults>
</compile_context>

<pallas_src>
import jax
import jax.numpy as jnp
from jax.experimental import pallas as pl
from jax.experimental.pallas import tpu as pltpu


def lstm_fc_kernel(x_ref, h0_ref, c0_ref, wih_ref, whh_ref, b_ref,
                   wfc_ref, bfc_ref,
                   out_ref, hN_ref, cN_ref,
                   gx_ref, hhist_ref):
    """Whole-sequence LSTM + FC head; everything VMEM-resident.

    x_ref:    (T*Bp, Din)  time-major, batch-padded, flattened
    h0/c0:    (Bp, H)
    wih_ref:  (Din, 4H)   whh_ref: (H, 4H)   b_ref: (1, 4H)  (b_ih + b_hh)
    wfc_ref:  (H, Dout)   bfc_ref: (1, Dout)
    out_ref:  (T*Bp, Dout)
    hN/cN:    (Bp, H)
    gx_ref:   scratch (T*Bp, 4H) f32 -- hoisted input projection
    hhist:    scratch (T*Bp, H)  f32 -- per-step hidden states
    """
    Bp, H = h0_ref.shape
    TB = hhist_ref.shape[0]
    T = TB // Bp

    # Hoisted input projection + bias for ALL timesteps: one large MXU matmul.
    gx_ref[...] = (jnp.dot(x_ref[...].astype(jnp.float32), wih_ref[...],
                           preferred_element_type=jnp.float32)
                   + b_ref[...].astype(jnp.float32))

    whh = whh_ref[...].astype(jnp.float32)   # hoisted out of the loop

    def step(t, carry):
        h_prev, c_prev = carry
        row0 = pl.multiple_of(t * Bp, 8)     # Bp is a multiple of 8
        gates = gx_ref[pl.ds(row0, Bp), :] + jnp.dot(
            h_prev, whh, preferred_element_type=jnp.float32)
        # At the real module size (H=256) these gate slices are 128-lane
        # aligned (free); at the toy H=32 they are intra-vreg selects.
        i_g = jax.nn.sigmoid(gates[:, 0 * H:1 * H])
        f_g = jax.nn.sigmoid(gates[:, 1 * H:2 * H])
        g_g = jnp.tanh(gates[:, 2 * H:3 * H])
        o_g = jax.nn.sigmoid(gates[:, 3 * H:4 * H])
        c_new = f_g * c_prev + i_g * g_g
        h_new = o_g * jnp.tanh(c_new)
        hhist_ref[pl.ds(row0, Bp), :] = h_new
        return h_new, c_new

    h0 = h0_ref[...].astype(jnp.float32)
    c0 = c0_ref[...].astype(jnp.float32)
    hN, cN = jax.lax.fori_loop(0, T, step, (h0, c0), unroll=(T <= 32))

    hN_ref[...] = hN.astype(hN_ref.dtype)
    cN_ref[...] = cN.astype(cN_ref.dtype)

    # Batched FC head over all timesteps: one matmul + one slab write.
    out_ref[...] = (jnp.dot(hhist_ref[...], wfc_ref[...],
                            preferred_element_type=jnp.float32)
                    + bfc_ref[...].astype(jnp.float32)).astype(out_ref.dtype)


@jax.jit
def identity_generator_forward(x, hidden, cell, w_ih_t, w_hh_t, b, w_fc_t, b_fc):
    """Mirrors IdentityGenerator.forward(x, hidden, cell).

    x:      (B, T, D_in) or (B, D_in)   (batch_first, like PyTorch)
    hidden: (1, B, H),  cell: (1, B, H)
    returns (out (B, T, D_out), hidden (1, B, H), cell (1, B, H))
    """
    if x.ndim == 2:
        x = x[:, None, :]                       # unsqueeze(1)
    B, T, Din = x.shape
    H = hidden.shape[-1]
    Dout = w_fc_t.shape[1]
    Bp = ((B + 7) // 8) * 8                     # pad batch to full f32 sublanes

    h0 = hidden[0]
    c0 = cell[0]
    x_tm = jnp.transpose(x, (1, 0, 2))          # time-major (T, B, Din)
    if Bp != B:
        pad = Bp - B
        x_tm = jnp.pad(x_tm, ((0, 0), (0, pad), (0, 0)))
        h0 = jnp.pad(h0, ((0, pad), (0, 0)))
        c0 = jnp.pad(c0, ((0, pad), (0, 0)))
    x_flat = x_tm.reshape(T * Bp, Din)

    out_flat, hN, cN = pl.pallas_call(
        lstm_fc_kernel,
        out_shape=(
            jax.ShapeDtypeStruct((T * Bp, Dout), x.dtype),
            jax.ShapeDtypeStruct((Bp, H), x.dtype),
            jax.ShapeDtypeStruct((Bp, H), x.dtype),
        ),
        grid_spec=pltpu.PrefetchScalarGridSpec(
            num_scalar_prefetch=0,
            grid=(1,),                          # single invocation; time loop in-kernel
            in_specs=[
                pl.BlockSpec((T * Bp, Din), lambda i: (0, 0)),    # x (flat, time-major)
                pl.BlockSpec((Bp, H), lambda i: (0, 0)),          # h0
                pl.BlockSpec((Bp, H), lambda i: (0, 0)),          # c0
                pl.BlockSpec((Din, 4 * H), lambda i: (0, 0)),     # W_ih^T
                pl.BlockSpec((H, 4 * H), lambda i: (0, 0)),       # W_hh^T
                pl.BlockSpec((1, 4 * H), lambda i: (0, 0)),       # b_ih + b_hh
                pl.BlockSpec((H, Dout), lambda i: (0, 0)),        # W_fc^T
                pl.BlockSpec((1, Dout), lambda i: (0, 0)),        # b_fc
            ],
            out_specs=[
                pl.BlockSpec((T * Bp, Dout), lambda i: (0, 0)),   # all-timestep out
                pl.BlockSpec((Bp, H), lambda i: (0, 0)),          # final hidden
                pl.BlockSpec((Bp, H), lambda i: (0, 0)),          # final cell
            ],
            scratch_shapes=[
                pltpu.VMEM((T * Bp, 4 * H), jnp.float32),         # hoisted x-projection
                pltpu.VMEM((T * Bp, H), jnp.float32),             # hidden-state history
            ],
        ),
        compiler_params=pltpu.CompilerParams(
            dimension_semantics=("arbitrary",)),
    )(x_flat, h0, c0, w_ih_t, w_hh_t, b, w_fc_t, b_fc)

    out = jnp.transpose(out_flat.reshape(T, Bp, Dout), (1, 0, 2))[:B]
    return out, hN[None, :B], cN[None, :B]


def reference_forward(x, hidden, cell, w_ih_t, w_hh_t, b, w_fc_t, b_fc):
    """Pure-JAX reference matching PyTorch LSTM + Linear semantics."""
    if x.ndim == 2:
        x = x[:, None, :]
    H = hidden.shape[-1]
    h, c = hidden[0], cell[0]

    def step(carry, x_t):
        h, c = carry
        gates = x_t @ w_ih_t + h @ w_hh_t + b[0]
        i = jax.nn.sigmoid(gates[:, 0 * H:1 * H])
        f = jax.nn.sigmoid(gates[:, 1 * H:2 * H])
        g = jnp.tanh(gates[:, 2 * H:3 * H])
        o = jax.nn.sigmoid(gates[:, 3 * H:4 * H])
        c = f * c + i * g
        h = o * jnp.tanh(c)
        return (h, c), h @ w_fc_t + b_fc[0]

    (h, c), ys = jax.lax.scan(step, (h, c), jnp.transpose(x, (1, 0, 2)))
    return jnp.transpose(ys, (1, 0, 2)), h[None], c[None]


if __name__ == "__main__":
    # Small shapes consistent with the module: input_size == output_size.
    B, T, Din, H = 2, 8, 16, 32
    Dout = Din
    num_layers = 1

    key = jax.random.PRNGKey(0)
    kx, kih, khh, kbi, kbh, kfw, kfb = jax.random.split(key, 7)

    # PyTorch stores W_ih:(4H,Din), W_hh:(4H,H); we keep transposed versions
    # for direct right-multiplication. Gate order i|f|g|o.
    scale = 1.0 / jnp.sqrt(H)
    w_ih_t = jax.random.uniform(kih, (Din, 4 * H), jnp.float32, -scale, scale)
    w_hh_t = jax.random.uniform(khh, (H, 4 * H), jnp.float32, -scale, scale)
    b_ih = jax.random.uniform(kbi, (4 * H,), jnp.float32, -scale, scale)
    b_hh = jax.random.uniform(kbh, (4 * H,), jnp.float32, -scale, scale)
    b = (b_ih + b_hh)[None, :]                                   # (1, 4H)
    w_fc_t = jax.random.uniform(kfw, (H, Dout), jnp.float32, -scale, scale)
    b_fc = jax.random.uniform(kfb, (Dout,), jnp.float32, -scale, scale)[None, :]

    # Inputs: x (B, T, Din); hidden/cell as in init_hidden -> zeros (1, B, H).
    x = jax.random.normal(kx, (B, T, Din), jnp.float32)
    hidden = jnp.zeros((num_layers, B, H), jnp.float32)
    cell = jnp.zeros((num_layers, B, H), jnp.float32)

    out, hN, cN = identity_generator_forward(
        x, hidden, cell, w_ih_t, w_hh_t, b, w_fc_t, b_fc)
    jax.block_until_ready((out, hN, cN))

    # Sanity check vs pure-JAX reference.
    out_r, hN_r, cN_r = reference_forward(
        x, hidden, cell, w_ih_t, w_hh_t, b, w_fc_t, b_fc)
    assert out.shape == (B, T, Dout) and hN.shape == (1, B, H) and cN.shape == (1, B, H)
    assert jnp.allclose(out, out_r, atol=1e-5, rtol=1e-5)
    assert jnp.allclose(hN, hN_r, atol=1e-5, rtol=1e-5)
    assert jnp.allclose(cN, cN_r, atol=1e-5, rtol=1e-5)

    print("KERNEL_OK")
</pallas_src>

<mosaic_0001>
module attributes {stable_mosaic.version = 11 : i64} {
  func.func @lstm_fc_kernel(%arg0: i32, %arg1: memref<64x16xf32, #tpu.memory_space<vmem>>, %arg2: memref<8x32xf32, #tpu.memory_space<vmem>>, %arg3: memref<8x32xf32, #tpu.memory_space<vmem>>, %arg4: memref<16x128xf32, #tpu.memory_space<vmem>>, %arg5: memref<32x128xf32, #tpu.memory_space<vmem>>, %arg6: memref<1x128xf32, #tpu.memory_space<vmem>>, %arg7: memref<32x16xf32, #tpu.memory_space<vmem>>, %arg8: memref<1x16xf32, #tpu.memory_space<vmem>>, %arg9: memref<64x16xf32, #tpu.memory_space<vmem>>, %arg10: memref<8x32xf32, #tpu.memory_space<vmem>>, %arg11: memref<8x32xf32, #tpu.memory_space<vmem>>, %arg12: memref<64x128xf32, #tpu.memory_space<vmem>>, %arg13: memref<64x32xf32, #tpu.memory_space<vmem>>) attributes {dimension_semantics = [#tpu.dimension_semantics<arbitrary>], iteration_bounds = array<i64: 1>, scalar_prefetch = 0 : i64, scratch_operands = 2 : i64, tpu.core_type = #tpu.core_type<tc>, window_params = [{pipeline_mode = #tpu.pipeline_mode<synchronous>, transform_indices = @transform_0, window_bounds = array<i64: 64, 16>}, {pipeline_mode = #tpu.pipeline_mode<synchronous>, transform_indices = @transform_1, window_bounds = array<i64: 8, 32>}, {pipeline_mode = #tpu.pipeline_mode<synchronous>, transform_indices = @transform_2, window_bounds = array<i64: 8, 32>}, {pipeline_mode = #tpu.pipeline_mode<synchronous>, transform_indices = @transform_3, window_bounds = array<i64: 16, 128>}, {pipeline_mode = #tpu.pipeline_mode<synchronous>, transform_indices = @transform_4, window_bounds = array<i64: 32, 128>}, {pipeline_mode = #tpu.pipeline_mode<synchronous>, transform_indices = @transform_5, window_bounds = array<i64: 1, 128>}, {pipeline_mode = #tpu.pipeline_mode<synchronous>, transform_indices = @transform_6, window_bounds = array<i64: 32, 16>}, {pipeline_mode = #tpu.pipeline_mode<synchronous>, transform_indices = @transform_7, window_bounds = array<i64: 1, 16>}, {pipeline_mode = #tpu.pipeline_mode<synchronous>, transform_indices = @transform_8, window_bounds = array<i64: 64, 16>}, {pipeline_mode = #tpu.pipeline_mode<synchronous>, transform_indices = @transform_9, window_bounds = array<i64: 8, 32>}, {pipeline_mode = #tpu.pipeline_mode<synchronous>, transform_indices = @transform_10, window_bounds = array<i64: 8, 32>}]} {
    %c0 = arith.constant 0 : index
    %c0_0 = arith.constant 0 : index
    %0 = vector.load %arg1[%c0, %c0_0] : memref<64x16xf32, #tpu.memory_space<vmem>>, vector<64x16xf32>
    %c0_1 = arith.constant 0 : index
    %c0_2 = arith.constant 0 : index
    %1 = vector.load %arg4[%c0_1, %c0_2] : memref<16x128xf32, #tpu.memory_space<vmem>>, vector<16x128xf32>
    %cst = arith.constant dense<0.000000e+00> : vector<64x128xf32>
    %2 = tpu.matmul %0, %1, %cst {dimension_numbers = #tpu.dot_dimension_numbers<[1], [0], [0], [1], [0, 0, 1, 1], [], []>} : vector<64x16xf32>, vector<16x128xf32>, vector<64x128xf32> -> vector<64x128xf32>
    %c0_3 = arith.constant 0 : index
    %c0_4 = arith.constant 0 : index
    %3 = vector.load %arg6[%c0_3, %c0_4] : memref<1x128xf32, #tpu.memory_space<vmem>>, vector<1x128xf32>
    %4 = vector.broadcast %3 : vector<1x128xf32> to vector<64x128xf32>
    %5 = arith.addf %2, %4 : vector<64x128xf32>
    %c0_5 = arith.constant 0 : index
    %c0_6 = arith.constant 0 : index
    %6 = vector.load %arg12[%c0_5, %c0_6] : memref<64x128xf32, #tpu.memory_space<vmem>>, vector<64x128xf32>
    tpu.vector_store %arg12[%c0_5, %c0_6], %5 {strides = array<i32>} : memref<64x128xf32, #tpu.memory_space<vmem>>, vector<64x128xf32>,
    %c0_7 = arith.constant 0 : index
    %c0_8 = arith.constant 0 : index
    %7 = vector.load %arg5[%c0_7, %c0_8] : memref<32x128xf32, #tpu.memory_space<vmem>>, vector<32x128xf32>
    %c0_9 = arith.constant 0 : index
    %c0_10 = arith.constant 0 : index
    %8 = vector.load %arg2[%c0_9, %c0_10] : memref<8x32xf32, #tpu.memory_space<vmem>>, vector<8x32xf32>
    %c0_11 = arith.constant 0 : index
    %c0_12 = arith.constant 0 : index
    %9 = vector.load %arg3[%c0_11, %c0_12] : memref<8x32xf32, #tpu.memory_space<vmem>>, vector<8x32xf32>
    %c0_i32 = arith.constant 0 : i32
    %c8_i32 = arith.constant 8 : i32
    %10 = arith.muli %c0_i32, %c8_i32 : i32
    %11 = tpu.assume_multiple %10, 8 : i32
    %12 = arith.index_cast %11 : i32 to index
    %c0_13 = arith.constant 0 : index
    %13 = vector.load %arg12[%12, %c0_13] : memref<64x128xf32, #tpu.memory_space<vmem>>, vector<8x128xf32>
    %cst_14 = arith.constant dense<0.000000e+00> : vector<8x128xf32>
    %14 = tpu.matmul %8, %7, %cst_14 {dimension_numbers = #tpu.dot_dimension_numbers<[1], [0], [0], [1], [0, 0, 1, 1], [], []>} : vector<8x32xf32>, vector<32x128xf32>, vector<8x128xf32> -> vector<8x128xf32>
    %15 = arith.addf %13, %14 : vector<8x128xf32>
    %16 = vector.extract_strided_slice %15 {offsets = [0, 0], sizes = [8, 32], strides = [1, 1]} : vector<8x128xf32> to vector<8x32xf32>
    %17 = arith.negf %16 : vector<8x32xf32>
    %18 = math.exp %17 : vector<8x32xf32>
    %cst_15 = arith.constant 1.000000e+00 : f32
    %19 = vector.broadcast %cst_15 : f32 to vector<8x32xf32>
    %20 = arith.addf %19, %18 : vector<8x32xf32>
    %21 = arith.divf %19, %20 : vector<8x32xf32>
    %22 = vector.extract_strided_slice %15 {offsets = [0, 32], sizes = [8, 32], strides = [1, 1]} : vector<8x128xf32> to vector<8x32xf32>
    %23 = arith.negf %22 : vector<8x32xf32>
    %24 = math.exp %23 : vector<8x32xf32>
    %cst_16 = arith.constant 1.000000e+00 : f32
    %25 = vector.broadcast %cst_16 : f32 to vector<8x32xf32>
    %26 = arith.addf %25, %24 : vector<8x32xf32>
    %27 = arith.divf %25, %26 : vector<8x32xf32>
    %28 = vector.extract_strided_slice %15 {offsets = [0, 64], sizes = [8, 32], strides = [1, 1]} : vector<8x128xf32> to vector<8x32xf32>
    %29 = math.tanh %28 : vector<8x32xf32>
    %30 = vector.extract_strided_slice %15 {offsets = [0, 96], sizes = [8, 32], strides = [1, 1]} : vector<8x128xf32> to vector<8x32xf32>
    %31 = arith.negf %30 : vector<8x32xf32>
    %32 = math.exp %31 : vector<8x32xf32>
    %cst_17 = arith.constant 1.000000e+00 : f32
    %33 = vector.broadcast %cst_17 : f32 to vector<8x32xf32>
    %34 = arith.addf %33, %32 : vector<8x32xf32>
    %35 = arith.divf %33, %34 : vector<8x32xf32>
    %36 = arith.mulf %27, %9 : vector<8x32xf32>
    %37 = arith.mulf %21, %29 : vector<8x32xf32>
    %38 = arith.addf %36, %37 : vector<8x32xf32>
    %39 = math.tanh %38 : vector<8x32xf32>
    %40 = arith.mulf %35, %39 : vector<8x32xf32>
    %41 = arith.index_cast %11 : i32 to index
    %c0_18 = arith.constant 0 : index
    %42 = vector.load %arg13[%41, %c0_18] : memref<64x32xf32, #tpu.memory_space<vmem>>, vector<8x32xf32>
    tpu.vector_store %arg13[%41, %c0_18], %40 {strides = array<i32>} : memref<64x32xf32, #tpu.memory_space<vmem>>, vector<8x32xf32>,
    %c1_i32 = arith.constant 1 : i32
    %c8_i32_19 = arith.constant 8 : i32
    %43 = arith.muli %c1_i32, %c8_i32_19 : i32
    %44 = tpu.assume_multiple %43, 8 : i32
    %45 = arith.index_cast %44 : i32 to index
    %c0_20 = arith.constant 0 : index
    %46 = vector.load %arg12[%45, %c0_20] : memref<64x128xf32, #tpu.memory_space<vmem>>, vector<8x128xf32>
    %cst_21 = arith.constant dense<0.000000e+00> : vector<8x128xf32>
    %47 = tpu.matmul %40, %7, %cst_21 {dimension_numbers = #tpu.dot_dimension_numbers<[1], [0], [0], [1], [0, 0, 1, 1], [], []>} : vector<8x32xf32>, vector<32x128xf32>, vector<8x128xf32> -> vector<8x128xf32>
    %48 = arith.addf %46, %47 : vector<8x128xf32>
    %49 = vector.extract_strided_slice %48 {offsets = [0, 0], sizes = [8, 32], strides = [1, 1]} : vector<8x128xf32> to vector<8x32xf32>
    %50 = arith.negf %49 : vector<8x32xf32>
    %51 = math.exp %50 : vector<8x32xf32>
    %cst_22 = arith.constant 1.000000e+00 : f32
    %52 = vector.broadcast %cst_22 : f32 to vector<8x32xf32>
    %53 = arith.addf %52, %51 : vector<8x32xf32>
    %54 = arith.divf %52, %53 : vector<8x32xf32>
    %55 = vector.extract_strided_slice %48 {offsets = [0, 32], sizes = [8, 32], strides = [1, 1]} : vector<8x128xf32> to vector<8x32xf32>
    %56 = arith.negf %55 : vector<8x32xf32>
    %57 = math.exp %56 : vector<8x32xf32>
    %cst_23 = arith.constant 1.000000e+00 : f32
    %58 = vector.broadcast %cst_23 : f32 to vector<8x32xf32>
    %59 = arith.addf %58, %57 : vector<8x32xf32>
    %60 = arith.divf %58, %59 : vector<8x32xf32>
    %61 = vector.extract_strided_slice %48 {offsets = [0, 64], sizes = [8, 32], strides = [1, 1]} : vector<8x128xf32> to vector<8x32xf32>
    %62 = math.tanh %61 : vector<8x32xf32>
    %63 = vector.extract_strided_slice %48 {offsets = [0, 96], sizes = [8, 32], strides = [1, 1]} : vector<8x128xf32> to vector<8x32xf32>
    %64 = arith.negf %63 : vector<8x32xf32>
    %65 = math.exp %64 : vector<8x32xf32>
    %cst_24 = arith.constant 1.000000e+00 : f32
    %66 = vector.broadcast %cst_24 : f32 to vector<8x32xf32>
    %67 = arith.addf %66, %65 : vector<8x32xf32>
    %68 = arith.divf %66, %67 : vector<8x32xf32>
    %69 = arith.mulf %60, %38 : vector<8x32xf32>
    %70 = arith.mulf %54, %62 : vector<8x32xf32>
    %71 = arith.addf %69, %70 : vector<8x32xf32>
    %72 = math.tanh %71 : vector<8x32xf32>
    %73 = arith.mulf %68, %72 : vector<8x32xf32>
    %74 = arith.index_cast %44 : i32 to index
    %c0_25 = arith.constant 0 : index
    %75 = vector.load %arg13[%74, %c0_25] : memref<64x32xf32, #tpu.memory_space<vmem>>, vector<8x32xf32>
    tpu.vector_store %arg13[%74, %c0_25], %73 {strides = array<i32>} : memref<64x32xf32, #tpu.memory_space<vmem>>, vector<8x32xf32>,
    %c2_i32 = arith.constant 2 : i32
    %c8_i32_26 = arith.constant 8 : i32
    %76 = arith.muli %c2_i32, %c8_i32_26 : i32
    %77 = tpu.assume_multiple %76, 8 : i32
    %78 = arith.index_cast %77 : i32 to index
    %c0_27 = arith.constant 0 : index
    %79 = vector.load %arg12[%78, %c0_27] : memref<64x128xf32, #tpu.memory_space<vmem>>, vector<8x128xf32>
    %cst_28 = arith.constant dense<0.000000e+00> : vector<8x128xf32>
    %80 = tpu.matmul %73, %7, %cst_28 {dimension_numbers = #tpu.dot_dimension_numbers<[1], [0], [0], [1], [0, 0, 1, 1], [], []>} : vector<8x32xf32>, vector<32x128xf32>, vector<8x128xf32> -> vector<8x128xf32>
    %81 = arith.addf %79, %80 : vector<8x128xf32>
    %82 = vector.extract_strided_slice %81 {offsets = [0, 0], sizes = [8, 32], strides = [1, 1]} : vector<8x128xf32> to vector<8x32xf32>
    %83 = arith.negf %82 : vector<8x32xf32>
    %84 = math.exp %83 : vector<8x32xf32>
    %cst_29 = arith.constant 1.000000e+00 : f32
    %85 = vector.broadcast %cst_29 : f32 to vector<8x32xf32>
    %86 = arith.addf %85, %84 : vector<8x32xf32>
    %87 = arith.divf %85, %86 : vector<8x32xf32>
    %88 = vector.extract_strided_slice %81 {offsets = [0, 32], sizes = [8, 32], strides = [1, 1]} : vector<8x128xf32> to vector<8x32xf32>
    %89 = arith.negf %88 : vector<8x32xf32>
    %90 = math.exp %89 : vector<8x32xf32>
    %cst_30 = arith.constant 1.000000e+00 : f32
    %91 = vector.broadcast %cst_30 : f32 to vector<8x32xf32>
    %92 = arith.addf %91, %90 : vector<8x32xf32>
    %93 = arith.divf %91, %92 : vector<8x32xf32>
    %94 = vector.extract_strided_slice %81 {offsets = [0, 64], sizes = [8, 32], strides = [1, 1]} : vector<8x128xf32> to vector<8x32xf32>
    %95 = math.tanh %94 : vector<8x32xf32>
    %96 = vector.extract_strided_slice %81 {offsets = [0, 96], sizes = [8, 32], strides = [1, 1]} : vector<8x128xf32> to vector<8x32xf32>
    %97 = arith.negf %96 : vector<8x32xf32>
    %98 = math.exp %97 : vector<8x32xf32>
    %cst_31 = arith.constant 1.000000e+00 : f32
    %99 = vector.broadcast %cst_31 : f32 to vector<8x32xf32>
    %100 = arith.addf %99, %98 : vector<8x32xf32>
    %101 = arith.divf %99, %100 : vector<8x32xf32>
    %102 = arith.mulf %93, %71 : vector<8x32xf32>
    %103 = arith.mulf %87, %95 : vector<8x32xf32>
    %104 = arith.addf %102, %103 : vector<8x32xf32>
    %105 = math.tanh %104 : vector<8x32xf32>
    %106 = arith.mulf %101, %105 : vector<8x32xf32>
    %107 = arith.index_cast %77 : i32 to index
    %c0_32 = arith.constant 0 : index
    %108 = vector.load %arg13[%107, %c0_32] : memref<64x32xf32, #tpu.memory_space<vmem>>, vector<8x32xf32>
    tpu.vector_store %arg13[%107, %c0_32], %106 {strides = array<i32>} : memref<64x32xf32, #tpu.memory_space<vmem>>, vector<8x32xf32>,
    %c3_i32 = arith.constant 3 : i32
    %c8_i32_33 = arith.constant 8 : i32
    %109 = arith.muli %c3_i32, %c8_i32_33 : i32
    %110 = tpu.assume_multiple %109, 8 : i32
    %111 = arith.index_cast %110 : i32 to index
    %c0_34 = arith.constant 0 : index
    %112 = vector.load %arg12[%111, %c0_34] : memref<64x128xf32, #tpu.memory_space<vmem>>, vector<8x128xf32>
    %cst_35 = arith.constant dense<0.000000e+00> : vector<8x128xf32>
    %113 = tpu.matmul %106, %7, %cst_35 {dimension_numbers = #tpu.dot_dimension_numbers<[1], [0], [0], [1], [0, 0, 1, 1], [], []>} : vector<8x32xf32>, vector<32x128xf32>, vector<8x128xf32> -> vector<8x128xf32>
    %114 = arith.addf %112, %113 : vector<8x128xf32>
    %115 = vector.extract_strided_slice %114 {offsets = [0, 0], sizes = [8, 32], strides = [1, 1]} : vector<8x128xf32> to vector<8x32xf32>
    %116 = arith.negf %115 : vector<8x32xf32>
    %117 = math.exp %116 : vector<8x32xf32>
    %cst_36 = arith.constant 1.000000e+00 : f32
    %118 = vector.broadcast %cst_36 : f32 to vector<8x32xf32>
    %119 = arith.addf %118, %117 : vector<8x32xf32>
    %120 = arith.divf %118, %119 : vector<8x32xf32>
    %121 = vector.extract_strided_slice %114 {offsets = [0, 32], sizes = [8, 32], strides = [1, 1]} : vector<8x128xf32> to vector<8x32xf32>
    %122 = arith.negf %121 : vector<8x32xf32>
    %123 = math.exp %122 : vector<8x32xf32>
    %cst_37 = arith.constant 1.000000e+00 : f32
    %124 = vector.broadcast %cst_37 : f32 to vector<8x32xf32>
    %125 = arith.addf %124, %123 : vector<8x32xf32>
    %126 = arith.divf %124, %125 : vector<8x32xf32>
    %127 = vector.extract_strided_slice %114 {offsets = [0, 64], sizes = [8, 32], strides = [1, 1]} : vector<8x128xf32> to vector<8x32xf32>
    %128 = math.tanh %127 : vector<8x32xf32>
    %129 = vector.extract_strided_slice %114 {offsets = [0, 96], sizes = [8, 32], strides = [1, 1]} : vector<8x128xf32> to vector<8x32xf32>
    %130 = arith.negf %129 : vector<8x32xf32>
    %131 = math.exp %130 : vector<8x32xf32>
    %cst_38 = arith.constant 1.000000e+00 : f32
    %132 = vector.broadcast %cst_38 : f32 to vector<8x32xf32>
    %133 = arith.addf %132, %131 : vector<8x32xf32>
    %134 = arith.divf %132, %133 : vector<8x32xf32>
    %135 = arith.mulf %126, %104 : vector<8x32xf32>
    %136 = arith.mulf %120, %128 : vector<8x32xf32>
    %137 = arith.addf %135, %136 : vector<8x32xf32>
    %138 = math.tanh %137 : vector<8x32xf32>
    %139 = arith.mulf %134, %138 : vector<8x32xf32>
    %140 = arith.index_cast %110 : i32 to index
    %c0_39 = arith.constant 0 : index
    %141 = vector.load %arg13[%140, %c0_39] : memref<64x32xf32, #tpu.memory_space<vmem>>, vector<8x32xf32>
    tpu.vector_store %arg13[%140, %c0_39], %139 {strides = array<i32>} : memref<64x32xf32, #tpu.memory_space<vmem>>, vector<8x32xf32>,
    %c4_i32 = arith.constant 4 : i32
    %c8_i32_40 = arith.constant 8 : i32
    %142 = arith.muli %c4_i32, %c8_i32_40 : i32
    %143 = tpu.assume_multiple %142, 8 : i32
    %144 = arith.index_cast %143 : i32 to index
    %c0_41 = arith.constant 0 : index
    %145 = vector.load %arg12[%144, %c0_41] : memref<64x128xf32, #tpu.memory_space<vmem>>, vector<8x128xf32>
    %cst_42 = arith.constant dense<0.000000e+00> : vector<8x128xf32>
    %146 = tpu.matmul %139, %7, %cst_42 {dimension_numbers = #tpu.dot_dimension_numbers<[1], [0], [0], [1], [0, 0, 1, 1], [], []>} : vector<8x32xf32>, vector<32x128xf32>, vector<8x128xf32> -> vector<8x128xf32>
    %147 = arith.addf %145, %146 : vector<8x128xf32>
    %148 = vector.extract_strided_slice %147 {offsets = [0, 0], sizes = [8, 32], strides = [1, 1]} : vector<8x128xf32> to vector<8x32xf32>
    %149 = arith.negf %148 : vector<8x32xf32>
    %150 = math.exp %149 : vector<8x32xf32>
    %cst_43 = arith.constant 1.000000e+00 : f32
    %151 = vector.broadcast %cst_43 : f32 to vector<8x32xf32>
    %152 = arith.addf %151, %150 : vector<8x32xf32>
    %153 = arith.divf %151, %152 : vector<8x32xf32>
    %154 = vector.extract_strided_slice %147 {offsets = [0, 32], sizes = [8, 32], strides = [1, 1]} : vector<8x128xf32> to vector<8x32xf32>
    %155 = arith.negf %154 : vector<8x32xf32>
    %156 = math.exp %155 : vector<8x32xf32>
    %cst_44 = arith.constant 1.000000e+00 : f32
    %157 = vector.broadcast %cst_44 : f32 to vector<8x32xf32>
    %158 = arith.addf %157, %156 : vector<8x32xf32>
    %159 = arith.divf %157, %158 : vector<8x32xf32>
    %160 = vector.extract_strided_slice %147 {offsets = [0, 64], sizes = [8, 32], strides = [1, 1]} : vector<8x128xf32> to vector<8x32xf32>
    %161 = math.tanh %160 : vector<8x32xf32>
    %162 = vector.extract_strided_slice %147 {offsets = [0, 96], sizes = [8, 32], strides = [1, 1]} : vector<8x128xf32> to vector<8x32xf32>
    %163 = arith.negf %162 : vector<8x32xf32>
    %164 = math.exp %163 : vector<8x32xf32>
    %cst_45 = arith.constant 1.000000e+00 : f32
    %165 = vector.broadcast %cst_45 : f32 to vector<8x32xf32>
    %166 = arith.addf %165, %164 : vector<8x32xf32>
    %167 = arith.divf %165, %166 : vector<8x32xf32>
    %168 = arith.mulf %159, %137 : vector<8x32xf32>
    %169 = arith.mulf %153, %161 : vector<8x32xf32>
    %170 = arith.addf %168, %169 : vector<8x32xf32>
    %171 = math.tanh %170 : vector<8x32xf32>
    %172 = arith.mulf %167, %171 : vector<8x32xf32>
    %173 = arith.index_cast %143 : i32 to index
    %c0_46 = arith.constant 0 : index
    %174 = vector.load %arg13[%173, %c0_46] : memref<64x32xf32, #tpu.memory_space<vmem>>, vector<8x32xf32>
    tpu.vector_store %arg13[%173, %c0_46], %172 {strides = array<i32>} : memref<64x32xf32, #tpu.memory_space<vmem>>, vector<8x32xf32>,
    %c5_i32 = arith.constant 5 : i32
    %c8_i32_47 = arith.constant 8 : i32
    %175 = arith.muli %c5_i32, %c8_i32_47 : i32
    %176 = tpu.assume_multiple %175, 8 : i32
    %177 = arith.index_cast %176 : i32 to index
    %c0_48 = arith.constant 0 : index
    %178 = vector.load %arg12[%177, %c0_48] : memref<64x128xf32, #tpu.memory_space<vmem>>, vector<8x128xf32>
    %cst_49 = arith.constant dense<0.000000e+00> : vector<8x128xf32>
    %179 = tpu.matmul %172, %7, %cst_49 {dimension_numbers = #tpu.dot_dimension_numbers<[1], [0], [0], [1], [0, 0, 1, 1], [], []>} : vector<8x32xf32>, vector<32x128xf32>, vector<8x128xf32> -> vector<8x128xf32>
    %180 = arith.addf %178, %179 : vector<8x128xf32>
    %181 = vector.extract_strided_slice %180 {offsets = [0, 0], sizes = [8, 32], strides = [1, 1]} : vector<8x128xf32> to vector<8x32xf32>
    %182 = arith.negf %181 : vector<8x32xf32>
    %183 = math.exp %182 : vector<8x32xf32>
    %cst_50 = arith.constant 1.000000e+00 : f32
    %184 = vector.broadcast %cst_50 : f32 to vector<8x32xf32>
    %185 = arith.addf %184, %183 : vector<8x32xf32>
    %186 = arith.divf %184, %185 : vector<8x32xf32>
    %187 = vector.extract_strided_slice %180 {offsets = [0, 32], sizes = [8, 32], strides = [1, 1]} : vector<8x128xf32> to vector<8x32xf32>
    %188 = arith.negf %187 : vector<8x32xf32>
    %189 = math.exp %188 : vector<8x32xf32>
    %cst_51 = arith.constant 1.000000e+00 : f32
    %190 = vector.broadcast %cst_51 : f32 to vector<8x32xf32>
    %191 = arith.addf %190, %189 : vector<8x32xf32>
    %192 = arith.divf %190, %191 : vector<8x32xf32>
    %193 = vector.extract_strided_slice %180 {offsets = [0, 64], sizes = [8, 32], strides = [1, 1]} : vector<8x128xf32> to vector<8x32xf32>
    %194 = math.tanh %193 : vector<8x32xf32>
    %195 = vector.extract_strided_slice %180 {offsets = [0, 96], sizes = [8, 32], strides = [1, 1]} : vector<8x128xf32> to vector<8x32xf32>
    %196 = arith.negf %195 : vector<8x32xf32>
    %197 = math.exp %196 : vector<8x32xf32>
    %cst_52 = arith.constant 1.000000e+00 : f32
    %198 = vector.broadcast %cst_52 : f32 to vector<8x32xf32>
    %199 = arith.addf %198, %197 : vector<8x32xf32>
    %200 = arith.divf %198, %199 : vector<8x32xf32>
    %201 = arith.mulf %192, %170 : vector<8x32xf32>
    %202 = arith.mulf %186, %194 : vector<8x32xf32>
    %203 = arith.addf %201, %202 : vector<8x32xf32>
    %204 = math.tanh %203 : vector<8x32xf32>
    %205 = arith.mulf %200, %204 : vector<8x32xf32>
    %206 = arith.index_cast %176 : i32 to index
    %c0_53 = arith.constant 0 : index
    %207 = vector.load %arg13[%206, %c0_53] : memref<64x32xf32, #tpu.memory_space<vmem>>, vector<8x32xf32>
    tpu.vector_store %arg13[%206, %c0_53], %205 {strides = array<i32>} : memref<64x32xf32, #tpu.memory_space<vmem>>, vector<8x32xf32>,
    %c6_i32 = arith.constant 6 : i32
    %c8_i32_54 = arith.constant 8 : i32
    %208 = arith.muli %c6_i32, %c8_i32_54 : i32
    %209 = tpu.assume_multiple %208, 8 : i32
    %210 = arith.index_cast %209 : i32 to index
    %c0_55 = arith.constant 0 : index
    %211 = vector.load %arg12[%210, %c0_55] : memref<64x128xf32, #tpu.memory_space<vmem>>, vector<8x128xf32>
    %cst_56 = arith.constant dense<0.000000e+00> : vector<8x128xf32>
    %212 = tpu.matmul %205, %7, %cst_56 {dimension_numbers = #tpu.dot_dimension_numbers<[1], [0], [0], [1], [0, 0, 1, 1], [], []>} : vector<8x32xf32>, vector<32x128xf32>, vector<8x128xf32> -> vector<8x128xf32>
    %213 = arith.addf %211, %212 : vector<8x128xf32>
    %214 = vector.extract_strided_slice %213 {offsets = [0, 0], sizes = [8, 32], strides = [1, 1]} : vector<8x128xf32> to vector<8x32xf32>
    %215 = arith.negf %214 : vector<8x32xf32>
    %216 = math.exp %215 : vector<8x32xf32>
    %cst_57 = arith.constant 1.000000e+00 : f32
    %217 = vector.broadcast %cst_57 : f32 to vector<8x32xf32>
    %218 = arith.addf %217, %216 : vector<8x32xf32>
    %219 = arith.divf %217, %218 : vector<8x32xf32>
    %220 = vector.extract_strided_slice %213 {offsets = [0, 32], sizes = [8, 32], strides = [1, 1]} : vector<8x128xf32> to vector<8x32xf32>
    %221 = arith.negf %220 : vector<8x32xf32>
    %222 = math.exp %221 : vector<8x32xf32>
    %cst_58 = arith.constant 1.000000e+00 : f32
    %223 = vector.broadcast %cst_58 : f32 to vector<8x32xf32>
    %224 = arith.addf %223, %222 : vector<8x32xf32>
    %225 = arith.divf %223, %224 : vector<8x32xf32>
    %226 = vector.extract_strided_slice %213 {offsets = [0, 64], sizes = [8, 32], strides = [1, 1]} : vector<8x128xf32> to vector<8x32xf32>
    %227 = math.tanh %226 : vector<8x32xf32>
    %228 = vector.extract_strided_slice %213 {offsets = [0, 96], sizes = [8, 32], strides = [1, 1]} : vector<8x128xf32> to vector<8x32xf32>
    %229 = arith.negf %228 : vector<8x32xf32>
    %230 = math.exp %229 : vector<8x32xf32>
    %cst_59 = arith.constant 1.000000e+00 : f32
    %231 = vector.broadcast %cst_59 : f32 to vector<8x32xf32>
    %232 = arith.addf %231, %230 : vector<8x32xf32>
    %233 = arith.divf %231, %232 : vector<8x32xf32>
    %234 = arith.mulf %225, %203 : vector<8x32xf32>
    %235 = arith.mulf %219, %227 : vector<8x32xf32>
    %236 = arith.addf %234, %235 : vector<8x32xf32>
    %237 = math.tanh %236 : vector<8x32xf32>
    %238 = arith.mulf %233, %237 : vector<8x32xf32>
    %239 = arith.index_cast %209 : i32 to index
    %c0_60 = arith.constant 0 : index
    %240 = vector.load %arg13[%239, %c0_60] : memref<64x32xf32, #tpu.memory_space<vmem>>, vector<8x32xf32>
    tpu.vector_store %arg13[%239, %c0_60], %238 {strides = array<i32>} : memref<64x32xf32, #tpu.memory_space<vmem>>, vector<8x32xf32>,
    %c7_i32 = arith.constant 7 : i32
    %c8_i32_61 = arith.constant 8 : i32
    %241 = arith.muli %c7_i32, %c8_i32_61 : i32
    %242 = tpu.assume_multiple %241, 8 : i32
    %243 = arith.index_cast %242 : i32 to index
    %c0_62 = arith.constant 0 : index
    %244 = vector.load %arg12[%243, %c0_62] : memref<64x128xf32, #tpu.memory_space<vmem>>, vector<8x128xf32>
    %cst_63 = arith.constant dense<0.000000e+00> : vector<8x128xf32>
    %245 = tpu.matmul %238, %7, %cst_63 {dimension_numbers = #tpu.dot_dimension_numbers<[1], [0], [0], [1], [0, 0, 1, 1], [], []>} : vector<8x32xf32>, vector<32x128xf32>, vector<8x128xf32> -> vector<8x128xf32>
    %246 = arith.addf %244, %245 : vector<8x128xf32>
    %247 = vector.extract_strided_slice %246 {offsets = [0, 0], sizes = [8, 32], strides = [1, 1]} : vector<8x128xf32> to vector<8x32xf32>
    %248 = arith.negf %247 : vector<8x32xf32>
    %249 = math.exp %248 : vector<8x32xf32>
    %cst_64 = arith.constant 1.000000e+00 : f32
    %250 = vector.broadcast %cst_64 : f32 to vector<8x32xf32>
    %251 = arith.addf %250, %249 : vector<8x32xf32>
    %252 = arith.divf %250, %251 : vector<8x32xf32>
    %253 = vector.extract_strided_slice %246 {offsets = [0, 32], sizes = [8, 32], strides = [1, 1]} : vector<8x128xf32> to vector<8x32xf32>
    %254 = arith.negf %253 : vector<8x32xf32>
    %255 = math.exp %254 : vector<8x32xf32>
    %cst_65 = arith.constant 1.000000e+00 : f32
    %256 = vector.broadcast %cst_65 : f32 to vector<8x32xf32>
    %257 = arith.addf %256, %255 : vector<8x32xf32>
    %258 = arith.divf %256, %257 : vector<8x32xf32>
    %259 = vector.extract_strided_slice %246 {offsets = [0, 64], sizes = [8, 32], strides = [1, 1]} : vector<8x128xf32> to vector<8x32xf32>
    %260 = math.tanh %259 : vector<8x32xf32>
    %261 = vector.extract_strided_slice %246 {offsets = [0, 96], sizes = [8, 32], strides = [1, 1]} : vector<8x128xf32> to vector<8x32xf32>
    %262 = arith.negf %261 : vector<8x32xf32>
    %263 = math.exp %262 : vector<8x32xf32>
    %cst_66 = arith.constant 1.000000e+00 : f32
    %264 = vector.broadcast %cst_66 : f32 to vector<8x32xf32>
    %265 = arith.addf %264, %263 : vector<8x32xf32>
    %266 = arith.divf %264, %265 : vector<8x32xf32>
    %267 = arith.mulf %258, %236 : vector<8x32xf32>
    %268 = arith.mulf %252, %260 : vector<8x32xf32>
    %269 = arith.addf %267, %268 : vector<8x32xf32>
    %270 = math.tanh %269 : vector<8x32xf32>
    %271 = arith.mulf %266, %270 : vector<8x32xf32>
    %272 = arith.index_cast %242 : i32 to index
    %c0_67 = arith.constant 0 : index
    %273 = vector.load %arg13[%272, %c0_67] : memref<64x32xf32, #tpu.memory_space<vmem>>, vector<8x32xf32>
    tpu.vector_store %arg13[%272, %c0_67], %271 {strides = array<i32>} : memref<64x32xf32, #tpu.memory_space<vmem>>, vector<8x32xf32>,
    %c8_i32_68 = arith.constant 8 : i32
    %c0_69 = arith.constant 0 : index
    %c0_70 = arith.constant 0 : index
    %274 = vector.load %arg10[%c0_69, %c0_70] : memref<8x32xf32, #tpu.memory_space<vmem>>, vector<8x32xf32>
    tpu.vector_store %arg10[%c0_69, %c0_70], %271 {strides = array<i32>} : memref<8x32xf32, #tpu.memory_space<vmem>>, vector<8x32xf32>,
    %c0_71 = arith.constant 0 : index
    %c0_72 = arith.constant 0 : index
    %275 = vector.load %arg11[%c0_71, %c0_72] : memref<8x32xf32, #tpu.memory_space<vmem>>, vector<8x32xf32>
    tpu.vector_store %arg11[%c0_71, %c0_72], %269 {strides = array<i32>} : memref<8x32xf32, #tpu.memory_space<vmem>>, vector<8x32xf32>,
    %c0_73 = arith.constant 0 : index
    %c0_74 = arith.constant 0 : index
    %276 = vector.load %arg13[%c0_73, %c0_74] : memref<64x32xf32, #tpu.memory_space<vmem>>, vector<64x32xf32>
    %c0_75 = arith.constant 0 : index
    %c0_76 = arith.constant 0 : index
    %277 = vector.load %arg7[%c0_75, %c0_76] : memref<32x16xf32, #tpu.memory_space<vmem>>, vector<32x16xf32>
    %cst_77 = arith.constant dense<0.000000e+00> : vector<64x16xf32>
    %278 = tpu.matmul %276, %277, %cst_77 {dimension_numbers = #tpu.dot_dimension_numbers<[1], [0], [0], [1], [0, 0, 1, 1], [], []>} : vector<64x32xf32>, vector<32x16xf32>, vector<64x16xf32> -> vector<64x16xf32>
    %c0_78 = arith.constant 0 : index
    %c0_79 = arith.constant 0 : index
    %279 = vector.load %arg8[%c0_78, %c0_79] : memref<1x16xf32, #tpu.memory_space<vmem>>, vector<1x16xf32>
    %280 = vector.broadcast %279 : vector<1x16xf32> to vector<64x16xf32>
    %281 = arith.addf %278, %280 : vector<64x16xf32>
    %c0_80 = arith.constant 0 : index
    %c0_81 = arith.constant 0 : index
    %282 = vector.load %arg9[%c0_80, %c0_81] : memref<64x16xf32, #tpu.memory_space<vmem>>, vector<64x16xf32>
    tpu.vector_store %arg9[%c0_80, %c0_81], %281 {strides = array<i32>} : memref<64x16xf32, #tpu.memory_space<vmem>>, vector<64x16xf32>,
    return
  }
  func.func @transform_0(%arg0: i32) -> (i32, i32) {
    %c0_i32 = arith.constant 0 : i32
    %c0_i32_0 = arith.constant 0 : i32
    %c0_i32_1 = arith.constant 0 : i32
    return %c0_i32, %c0_i32_0 : i32, i32
  }
  func.func @transform_1(%arg0: i32) -> (i32, i32) {
    %c0_i32 = arith.constant 0 : i32
    %c0_i32_0 = arith.constant 0 : i32
    %c0_i32_1 = arith.constant 0 : i32
    return %c0_i32, %c0_i32_0 : i32, i32
  }
  func.func @transform_2(%arg0: i32) -> (i32, i32) {
    %c0_i32 = arith.constant 0 : i32
    %c0_i32_0 = arith.constant 0 : i32
    %c0_i32_1 = arith.constant 0 : i32
    return %c0_i32, %c0_i32_0 : i32, i32
  }
  func.func @transform_3(%arg0: i32) -> (i32, i32) {
    %c0_i32 = arith.constant 0 : i32
    %c0_i32_0 = arith.constant 0 : i32
    %c0_i32_1 = arith.constant 0 : i32
    return %c0_i32, %c0_i32_0 : i32, i32
  }
  func.func @transform_4(%arg0: i32) -> (i32, i32) {
    %c0_i32 = arith.constant 0 : i32
    %c0_i32_0 = arith.constant 0 : i32
    %c0_i32_1 = arith.constant 0 : i32
    return %c0_i32, %c0_i32_0 : i32, i32
  }
  func.func @transform_5(%arg0: i32) -> (i32, i32) {
    %c0_i32 = arith.constant 0 : i32
    %c0_i32_0 = arith.constant 0 : i32
    %c0_i32_1 = arith.constant 0 : i32
    return %c0_i32, %c0_i32_0 : i32, i32
  }
  func.func @transform_6(%arg0: i32) -> (i32, i32) {
    %c0_i32 = arith.constant 0 : i32
    %c0_i32_0 = arith.constant 0 : i32
    %c0_i32_1 = arith.constant 0 : i32
    return %c0_i32, %c0_i32_0 : i32, i32
  }
  func.func @transform_7(%arg0: i32) -> (i32, i32) {
    %c0_i32 = arith.constant 0 : i32
    %c0_i32_0 = arith.constant 0 : i32
    %c0_i32_1 = arith.constant 0 : i32
    return %c0_i32, %c0_i32_0 : i32, i32
  }
  func.func @transform_8(%arg0: i32) -> (i32, i32) {
    %c0_i32 = arith.constant 0 : i32
    %c0_i32_0 = arith.constant 0 : i32
    %c0_i32_1 = arith.constant 0 : i32
    return %c0_i32, %c0_i32_0 : i32, i32
  }
  func.func @transform_9(%arg0: i32) -> (i32, i32) {
    %c0_i32 = arith.constant 0 : i32
    %c0_i32_0 = arith.constant 0 : i32
    %c0_i32_1 = arith.constant 0 : i32
    return %c0_i32, %c0_i32_0 : i32, i32
  }
  func.func @transform_10(%arg0: i32) -> (i32, i32) {
    %c0_i32 = arith.constant 0 : i32
    %c0_i32_0 = arith.constant 0 : i32
    %c0_i32_1 = arith.constant 0 : i32
    return %c0_i32, %c0_i32_0 : i32, i32
  }
}

</mosaic_0001>

<llo_original>
// kernel: identity_generator_forward.1
$region0: #{identity_generator_forward.1}
  #allocation0 [shape = 'u32[]', space=smem, size = 0x4, offset = 0x4, fixed_abs, tag = 'smem constant byte address 0x4 - core index']
  #allocation1 [shape = 'u32[144,128]{1,0:T(1,128)}', space=vmem, size = 0x12000, scoped, tag = 'internal scratch']
  #allocation2 [shape = 'f32[64,128]{1,0:T(8,128)}', space=vmem, size = 0x8000, scoped, tag = 'scratch operand']
  #allocation3 [shape = 'f32[64,32]{1,0:T(8,128)}', space=vmem, size = 0x8000, scoped, tag = 'scratch operand']
  %s0 = inlined_call_operand.vmem [shape: f32[64,16], index: 0, kind: input, shape index: {}]
  %s1 = inlined_call_operand.vmem [shape: f32[8,32], index: 1, kind: input, shape index: {}]
  %s2 = inlined_call_operand.vmem [shape: f32[8,32], index: 2, kind: input, shape index: {}]
  %s3 = inlined_call_operand.vmem [shape: f32[16,128], index: 3, kind: input, shape index: {}]
  %s4 = inlined_call_operand.vmem [shape: f32[32,128], index: 4, kind: input, shape index: {}]
  %s5 = inlined_call_operand.vmem [shape: f32[1,128], index: 5, kind: input, shape index: {}]
  %s6 = inlined_call_operand.vmem [shape: f32[32,16], index: 6, kind: input, shape index: {}]
  %s7 = inlined_call_operand.vmem [shape: f32[1,16], index: 7, kind: input, shape index: {}]
  %s8 = inlined_call_operand.vmem [shape: f32[64,16], index: 8, kind: output, shape index: {0}]
  %s9 = inlined_call_operand.vmem [shape: f32[8,32], index: 9, kind: output, shape index: {1}]
  %s10 = inlined_call_operand.vmem [shape: f32[8,32], index: 10, kind: output, shape index: {2}]
  %11 = xla_tuple %s8, %s9, %s10
  %s12 = sld [smem:[#allocation0]]
  $region58: #{identity_generator_forward.1} parent=0
    _
  %s14 = ssub.s32 1, %s12
  %s15 = scalar_select 0, %s14, %s12
  // Predicated region
  $region2: #{identity_generator_forward.1} parent=0 // pred_check
    _
  $region3: #{identity_generator_forward.1} parent=0 // pred_check_branch
    %17 = sbr.rel (0) target = $region5
  $region4: #{identity_generator_forward.1} parent=0 // pred_region
    _
  $region5: #{identity_generator_forward.1} parent=0 // pred_fallthru
    _
  // Predicated region
  $region6: #{identity_generator_forward.1} parent=0 // pred_check
    _
  $region7: #{identity_generator_forward.1} parent=0 // pred_check_branch
    %19 = sbr.rel (0) target = $region9
  $region8: #{identity_generator_forward.1} parent=0 // pred_region
    _
  $region9: #{identity_generator_forward.1} parent=0 // pred_fallthru
    _
  // Predicated region
  $region10: #{identity_generator_forward.1} parent=0 // pred_check
    _
  $region11: #{identity_generator_forward.1} parent=0 // pred_check_branch
    %21 = sbr.rel (0) target = $region13
  $region12: #{identity_generator_forward.1} parent=0 // pred_region
    _
  $region13: #{identity_generator_forward.1} parent=0 // pred_fallthru
    _
  // Predicated region
  $region14: #{identity_generator_forward.1} parent=0 // pred_check
    _
  $region15: #{identity_generator_forward.1} parent=0 // pred_check_branch
    %23 = sbr.rel (0) target = $region17
  $region16: #{identity_generator_forward.1} parent=0 // pred_region
    _
  $region17: #{identity_generator_forward.1} parent=0 // pred_fallthru
    _
  // Predicated region
  $region18: #{identity_generator_forward.1} parent=0 // pred_check
    _
  $region19: #{identity_generator_forward.1} parent=0 // pred_check_branch
    %25 = sbr.rel (0) target = $region21
  $region20: #{identity_generator_forward.1} parent=0 // pred_region
    _
  $region21: #{identity_generator_forward.1} parent=0 // pred_fallthru
    _
  // Predicated region
  $region22: #{identity_generator_forward.1} parent=0 // pred_check
    _
  $region23: #{identity_generator_forward.1} parent=0 // pred_check_branch
    %27 = sbr.rel (0) target = $region25
  $region24: #{identity_generator_forward.1} parent=0 // pred_region
    _
  $region25: #{identity_generator_forward.1} parent=0 // pred_fallthru
    _
  // Predicated region
  $region26: #{identity_generator_forward.1} parent=0 // pred_check
    _
  $region27: #{identity_generator_forward.1} parent=0 // pred_check_branch
    %29 = sbr.rel (0) target = $region29
  $region28: #{identity_generator_forward.1} parent=0 // pred_region
    _
  $region29: #{identity_generator_forward.1} parent=0 // pred_fallthru
    _
  // Predicated region
  $region30: #{identity_generator_forward.1} parent=0 // pred_check
    _
  $region31: #{identity_generator_forward.1} parent=0 // pred_check_branch
    %31 = sbr.rel (0) target = $region33
  $region32: #{identity_generator_forward.1} parent=0 // pred_region
    _
  $region33: #{identity_generator_forward.1} parent=0 // pred_fallthru
    _
  %v32 = vld [vmem:[%s0] sm:$0xff]
  %v33 = vld [vmem:[%s0 + $0x8] sm:$0xff]
  %v34 = vld [vmem:[%s0 + $0x10] sm:$0xff]
  %v35 = vld [vmem:[%s0 + $0x18] sm:$0xff]
  %v36 = vld [vmem:[%s0 + $0x20] sm:$0xff]
  %v37 = vld [vmem:[%s0 + $0x28] sm:$0xff]
  %v38 = vld [vmem:[%s0 + $0x30] sm:$0xff]
  %v39 = vld [vmem:[%s0 + $0x38] sm:$0xff]
  %v40 = vld [vmem:[%s3] sm:$0xff]
  %v41 = vld [vmem:[%s3 + $0x8] sm:$0xff]
  %v42 = vld [vmem:[%s5] sm:$0x1]
  %v44 = vlaneseq
  %v45 = vshrl.u32 %v44, 7
  %v46 = vsub.s32 0, %v45
  %v47 = vrot.slane %v42, %v46
  %vm49 = vcmask 130048
  %v51 = vsel %vm49, %v32, 0
  %v54 = vsel %vm49, %v33, 0
  %v57 = vsel %vm49, %v34, 0
  %v60 = vsel %vm49, %v35, 0
  %v63 = vsel %vm49, %v36, 0
  %v66 = vsel %vm49, %v37, 0
  %v69 = vsel %vm49, %v38, 0
  %v72 = vsel %vm49, %v39, 0
  %74 = vmatprep.subr.mxu0 0.0
  %75 = vmatpush1.msra.mxu0 0.0
  %76 = vmatprep.subr.mxu0 0.0
  %77 = vmatpush1.msra.mxu0 0.0
  %78 = vmatprep.subr.mxu0 0.0
  %79 = vmatpush1.msra.mxu0 0.0
  %80 = vmatprep.subr.mxu0 0.0
  %81 = vmatpush1.msra.mxu0 0.0
  %82 = vmatprep.subr.mxu0 0.0
  %83 = vmatpush1.msra.mxu0 0.0
  %84 = vmatprep.subr.mxu0 0.0
  %85 = vmatpush1.msra.mxu0 0.0
  %86 = vmatprep.subr.mxu0 0.0
  %87 = vmatpush1.msra.mxu0 0.0
  %88 = vmatprep.subr.mxu0 0.0
  %89 = vmatpush1.msra.mxu0 0.0
  %90 = vmatprep.subr.mxu0 0.0
  %91 = vmatpush1.msra.mxu0 0.0
  %92 = vmatprep.subr.mxu0 0.0
  %93 = vmatpush1.msra.mxu0 0.0
  %94 = vmatprep.subr.mxu0 0.0
  %95 = vmatpush1.msra.mxu0 0.0
  %96 = vmatprep.subr.mxu0 0.0
  %97 = vmatpush1.msra.mxu0 0.0
  %98 = vmatprep.subr.mxu0 0.0
  %99 = vmatpush1.msra.mxu0 0.0
  %100 = vmatprep.subr.mxu0 0.0
  %101 = vmatpush1.msra.mxu0 0.0
  %102 = vmatprep.subr.mxu0 0.0
  %103 = vmatpush1.msra.mxu0 %v41
  %104 = vmatprep.subr.mxu0 0.0
  %105 = vmatpush1.msra.mxu0 %v40
  %106 = vmatprep.subr.mxu0 0.0
  %107 = vmatpush2.msra.mxu0 0.0
  %108 = vmatprep.subr.mxu0 0.0
  %109 = vmatpush2.msra.mxu0 0.0
  %110 = vmatprep.subr.mxu0 0.0
  %111 = vmatpush2.msra.mxu0 0.0
  %112 = vmatprep.subr.mxu0 0.0
  %113 = vmatpush2.msra.mxu0 0.0
  %114 = vmatprep.subr.mxu0 0.0
  %115 = vmatpush2.msra.mxu0 0.0
  %116 = vmatprep.subr.mxu0 0.0
  %117 = vmatpush2.msra.mxu0 0.0
  %118 = vmatprep.subr.mxu0 0.0
  %119 = vmatpush2.msra.mxu0 0.0
  %120 = vmatprep.subr.mxu0 0.0
  %121 = vmatpush2.msra.mxu0 0.0
  %122 = vmatprep.subr.mxu0 0.0
  %123 = vmatpush2.msra.mxu0 0.0
  %124 = vmatprep.subr.mxu0 0.0
  %125 = vmatpush2.msra.mxu0 0.0
  %126 = vmatprep.subr.mxu0 0.0
  %127 = vmatpush2.msra.mxu0 0.0
  %128 = vmatprep.subr.mxu0 0.0
  %129 = vmatpush2.msra.mxu0 0.0
  %130 = vmatprep.subr.mxu0 0.0
  %131 = vmatpush2.msra.mxu0 0.0
  %132 = vmatprep.subr.mxu0 0.0
  %133 = vmatpush2.msra.mxu0 0.0
  %134 = vmatprep.subr.mxu0 0.0
  %135 = vmatpush2.msra.mxu0 0.0
  %136 = vmatprep.subr.mxu0 0.0
  %137 = vmatpush2.msra.mxu0 0.0
  %138 = vmatprep.mubr.f32.mxu0 0.0
  %139 = vmatmul.mubr.f32.gmra.mxu0 %v51
  %v140 = vpop.f32.mrf.mxu0
  %v141 = vadd.f32 %v47, %v140
  %v142 = vpop.f32.mrf.mxu0
  %143 = vmatprep.mubr.f32.mxu0 0.0
  %144 = vmatmul.mubr.f32.gmra.mxu0 %v54
  %v145 = vpop.f32.mrf.mxu0
  %v146 = vadd.f32 %v47, %v145
  %v147 = vpop.f32.mrf.mxu0
  %148 = vmatprep.mubr.f32.mxu0 0.0
  %149 = vmatmul.mubr.f32.gmra.mxu0 %v57
  %v150 = vpop.f32.mrf.mxu0
  %v151 = vadd.f32 %v47, %v150
  %v152 = vpop.f32.mrf.mxu0
  %153 = vmatprep.mubr.f32.mxu0 0.0
  %154 = vmatmul.mubr.f32.gmra.mxu0 %v60
  %v155 = vpop.f32.mrf.mxu0
  %v156 = vadd.f32 %v47, %v155
  %v157 = vpop.f32.mrf.mxu0
  %158 = vmatprep.mubr.f32.mxu0 0.0
  %159 = vmatmul.mubr.f32.gmra.mxu0 %v63
  %v160 = vpop.f32.mrf.mxu0
  %v161 = vadd.f32 %v47, %v160
  %v162 = vpop.f32.mrf.mxu0
  %163 = vmatprep.mubr.f32.mxu0 0.0
  %164 = vmatmul.mubr.f32.gmra.mxu0 %v66
  %v165 = vpop.f32.mrf.mxu0
  %v166 = vadd.f32 %v47, %v165
  %v167 = vpop.f32.mrf.mxu0
  %168 = vmatprep.mubr.f32.mxu0 0.0
  %169 = vmatmul.mubr.f32.gmra.mxu0 %v69
  %v170 = vpop.f32.mrf.mxu0
  %v171 = vadd.f32 %v47, %v170
  %v172 = vpop.f32.mrf.mxu0
  %173 = vmatprep.mubr.f32.mxu0 0.0
  %174 = vmatmul.mubr.f32.gmra.mxu0 %v72
  %v175 = vpop.f32.mrf.mxu0
  %v176 = vadd.f32 %v47, %v175
  %v177 = vpop.f32.mrf.mxu0
  %178 = vdwg.mxu0
  %179 = vst [vmem:[#allocation2] sm:$0xff] %v141
  %180 = vst [vmem:[#allocation2 + $0x8] sm:$0xff] %v146
  %181 = vst [vmem:[#allocation2 + $0x10] sm:$0xff] %v151
  %182 = vst [vmem:[#allocation2 + $0x18] sm:$0xff] %v156
  %183 = vst [vmem:[#allocation2 + $0x20] sm:$0xff] %v161
  %184 = vst [vmem:[#allocation2 + $0x28] sm:$0xff] %v166
  %185 = vst [vmem:[#allocation2 + $0x30] sm:$0xff] %v171
  %186 = vst [vmem:[#allocation2 + $0x38] sm:$0xff] %v176
  %v187 = vld [vmem:[%s4] sm:$0xff]
  %v188 = vld [vmem:[%s4 + $0x8] sm:$0xff]
  %v189 = vld [vmem:[%s4 + $0x10] sm:$0xff]
  %v190 = vld [vmem:[%s4 + $0x18] sm:$0xff]
  %v191 = vld [vmem:[%s1] sm:$0xff]
  %v192 = vld [vmem:[%s2] sm:$0xff]
  %v193 = vld [vmem:[#allocation2] sm:$0xff]
  %vm194 = vcmask 261120
  %v196 = vsel %vm194, %v191, 0
  %198 = vmatprep.subr.mxu0 0.0
  %199 = vmatpush1.msra.mxu0 0.0
  %200 = vmatprep.subr.mxu0 0.0
  %201 = vmatpush1.msra.mxu0 0.0
  %202 = vmatprep.subr.mxu0 0.0
  %203 = vmatpush1.msra.mxu0 0.0
  %204 = vmatprep.subr.mxu0 0.0
  %205 = vmatpush1.msra.mxu0 0.0
  %206 = vmatprep.subr.mxu0 0.0
  %207 = vmatpush1.msra.mxu0 0.0
  %208 = vmatprep.subr.mxu0 0.0
  %209 = vmatpush1.msra.mxu0 0.0
  %210 = vmatprep.subr.mxu0 0.0
  %211 = vmatpush1.msra.mxu0 0.0
  %212 = vmatprep.subr.mxu0 0.0
  %213 = vmatpush1.msra.mxu0 0.0
  %214 = vmatprep.subr.mxu0 0.0
  %215 = vmatpush1.msra.mxu0 0.0
  %216 = vmatprep.subr.mxu0 0.0
  %217 = vmatpush1.msra.mxu0 0.0
  %218 = vmatprep.subr.mxu0 0.0
  %219 = vmatpush1.msra.mxu0 0.0
  %220 = vmatprep.subr.mxu0 0.0
  %221 = vmatpush1.msra.mxu0 0.0
  %222 = vmatprep.subr.mxu0 0.0
  %223 = vmatpush1.msra.mxu0 %v190
  %224 = vmatprep.subr.mxu0 0.0
  %225 = vmatpush1.msra.mxu0 %v189
  %226 = vmatprep.subr.mxu0 0.0
  %227 = vmatpush1.msra.mxu0 %v188
  %228 = vmatprep.subr.mxu0 0.0
  %229 = vmatpush1.msra.mxu0 %v187
  %230 = vmatprep.subr.mxu0 0.0
  %231 = vmatpush2.msra.mxu0 0.0
  %232 = vmatprep.subr.mxu0 0.0
  %233 = vmatpush2.msra.mxu0 0.0
  %234 = vmatprep.subr.mxu0 0.0
  %235 = vmatpush2.msra.mxu0 0.0
  %236 = vmatprep.subr.mxu0 0.0
  %237 = vmatpush2.msra.mxu0 0.0
  %238 = vmatprep.subr.mxu0 0.0
  %239 = vmatpush2.msra.mxu0 0.0
  %240 = vmatprep.subr.mxu0 0.0
  %241 = vmatpush2.msra.mxu0 0.0
  %242 = vmatprep.subr.mxu0 0.0
  %243 = vmatpush2.msra.mxu0 0.0
  %244 = vmatprep.subr.mxu0 0.0
  %245 = vmatpush2.msra.mxu0 0.0
  %246 = vmatprep.subr.mxu0 0.0
  %247 = vmatpush2.msra.mxu0 0.0
  %248 = vmatprep.subr.mxu0 0.0
  %249 = vmatpush2.msra.mxu0 0.0
  %250 = vmatprep.subr.mxu0 0.0
  %251 = vmatpush2.msra.mxu0 0.0
  %252 = vmatprep.subr.mxu0 0.0
  %253 = vmatpush2.msra.mxu0 0.0
  %254 = vmatprep.subr.mxu0 0.0
  %255 = vmatpush2.msra.mxu0 0.0
  %256 = vmatprep.subr.mxu0 0.0
  %257 = vmatpush2.msra.mxu0 0.0
  %258 = vmatprep.subr.mxu0 0.0
  %259 = vmatpush2.msra.mxu0 0.0
  %260 = vmatprep.subr.mxu0 0.0
  %261 = vmatpush2.msra.mxu0 0.0
  %262 = vmatprep.mubr.f32.mxu0 0.0
  %263 = vmatmul.mubr.f32.gmra.mxu0 %v196
  %v264 = vpop.f32.mrf.mxu0
  %v265 = vadd.f32 0.0, %v264
  %v266 = vpop.f32.mrf.mxu0
  %267 = vdwg.mxu0
  %v268 = vadd.f32 %v193, %v265
  %v269 = vxor.u32 %v268, 2147483648
  %v270 = vmul.f32 %v269, 1.442695
  %v271 = vpow.pop %v270
  %v272 = vadd.f32 %v271, 1.0
  %v273 = vrcp.pop %v272
  %v274 = vmul.f32 1.0, %v273
  %v275 = vtanh.pop %v268
  %277 = vrot.lane.b32.xlu0 %v192, 32
  %v278 = vpop.permute.xlu0 %277
  %v280 = vmul.f32 %v274, %v278
  %282 = vrot.lane.b32.xlu0 %v275, 64
  %v283 = vpop.permute.xlu0 %282
  %v285 = vmul.f32 %v274, %v283
  %287 = vrot.lane.b32.xlu0 %v285, 32
  %v288 = vpop.permute.xlu0 %287
  %v290 = vadd.f32 %v280, %v288
  %v291 = vtanh.pop %v290
  %293 = vrot.lane.b32.xlu0 %v291, 64
  %v294 = vpop.permute.xlu0 %293
  %v296 = vmul.f32 %v274, %v294
  %298 = vrot.lane.b32.xlu0 %v296, 32
  %v299 = vpop.permute.xlu0 %298
  %301 = vst.msk [vmem:[#allocation3] sm:$0xff] %vm194, %v299
  %s302 = scalar_lea.vmem [#allocation2], 8
  %v303 = vld [vmem:[%s302] sm:$0xff]
  %v304 = vsel %vm194, %v299, 0
  %306 = vmatprep.subr.mxu0 0.0
  %307 = vmatpush1.msra.mxu0 0.0
  %308 = vmatprep.subr.mxu0 0.0
  %309 = vmatpush1.msra.mxu0 0.0
  %310 = vmatprep.subr.mxu0 0.0
  %311 = vmatpush1.msra.mxu0 0.0
  %312 = vmatprep.subr.mxu0 0.0
  %313 = vmatpush1.msra.mxu0 0.0
  %314 = vmatprep.subr.mxu0 0.0
  %315 = vmatpush1.msra.mxu0 0.0
  %316 = vmatprep.subr.mxu0 0.0
  %317 = vmatpush1.msra.mxu0 0.0
  %318 = vmatprep.subr.mxu0 0.0
  %319 = vmatpush1.msra.mxu0 0.0
  %320 = vmatprep.subr.mxu0 0.0
  %321 = vmatpush1.msra.mxu0 0.0
  %322 = vmatprep.subr.mxu0 0.0
  %323 = vmatpush1.msra.mxu0 0.0
  %324 = vmatprep.subr.mxu0 0.0
  %325 = vmatpush1.msra.mxu0 0.0
  %326 = vmatprep.subr.mxu0 0.0
  %327 = vmatpush1.msra.mxu0 0.0
  %328 = vmatprep.subr.mxu0 0.0
  %329 = vmatpush1.msra.mxu0 0.0
  %330 = vmatprep.subr.mxu0 0.0
  %331 = vmatpush1.msra.mxu0 %v190
  %332 = vmatprep.subr.mxu0 0.0
  %333 = vmatpush1.msra.mxu0 %v189
  %334 = vmatprep.subr.mxu0 0.0
  %335 = vmatpush1.msra.mxu0 %v188
  %336 = vmatprep.subr.mxu0 0.0
  %337 = vmatpush1.msra.mxu0 %v187
  %338 = vmatprep.subr.mxu0 0.0
  %339 = vmatpush2.msra.mxu0 0.0
  %340 = vmatprep.subr.mxu0 0.0
  %341 = vmatpush2.msra.mxu0 0.0
  %342 = vmatprep.subr.mxu0 0.0
  %343 = vmatpush2.msra.mxu0 0.0
  %344 = vmatprep.subr.mxu0 0.0
  %345 = vmatpush2.msra.mxu0 0.0
  %346 = vmatprep.subr.mxu0 0.0
  %347 = vmatpush2.msra.mxu0 0.0
  %348 = vmatprep.subr.mxu0 0.0
  %349 = vmatpush2.msra.mxu0 0.0
  %350 = vmatprep.subr.mxu0 0.0
  %351 = vmatpush2.msra.mxu0 0.0
  %352 = vmatprep.subr.mxu0 0.0
  %353 = vmatpush2.msra.mxu0 0.0
  %354 = vmatprep.subr.mxu0 0.0
  %355 = vmatpush2.msra.mxu0 0.0
  %356 = vmatprep.subr.mxu0 0.0
  %357 = vmatpush2.msra.mxu0 0.0
  %358 = vmatprep.subr.mxu0 0.0
  %359 = vmatpush2.msra.mxu0 0.0
  %360 = vmatprep.subr.mxu0 0.0
  %361 = vmatpush2.msra.mxu0 0.0
  %362 = vmatprep.subr.mxu0 0.0
  %363 = vmatpush2.msra.mxu0 0.0
  %364 = vmatprep.subr.mxu0 0.0
  %365 = vmatpush2.msra.mxu0 0.0
  %366 = vmatprep.subr.mxu0 0.0
  %367 = vmatpush2.msra.mxu0 0.0
  %368 = vmatprep.subr.mxu0 0.0
  %369 = vmatpush2.msra.mxu0 0.0
  %370 = vmatprep.mubr.f32.mxu0 0.0
  %371 = vmatmul.mubr.f32.gmra.mxu0 %v304
  %v372 = vpop.f32.mrf.mxu0
  %v373 = vadd.f32 0.0, %v372
  %v374 = vpop.f32.mrf.mxu0
  %375 = vdwg.mxu0
  %v376 = vadd.f32 %v303, %v373
  %v377 = vxor.u32 %v376, 2147483648
  %v378 = vmul.f32 %v377, 1.442695
  %v379 = vpow.pop %v378
  %v380 = vadd.f32 %v379, 1.0
  %v381 = vrcp.pop %v380
  %v382 = vmul.f32 1.0, %v381
  %v383 = vtanh.pop %v376
  %v384 = vmul.f32 %v382, %v290
  %386 = vrot.lane.b32.xlu0 %v383, 64
  %v387 = vpop.permute.xlu0 %386
  %v389 = vmul.f32 %v382, %v387
  %391 = vrot.lane.b32.xlu0 %v389, 32
  %v392 = vpop.permute.xlu0 %391
  %v394 = vadd.f32 %v384, %v392
  %v395 = vtanh.pop %v394
  %397 = vrot.lane.b32.xlu0 %v395, 64
  %v398 = vpop.permute.xlu0 %397
  %v400 = vmul.f32 %v382, %v398
  %402 = vrot.lane.b32.xlu0 %v400, 32
  %v403 = vpop.permute.xlu0 %402
  %s405 = scalar_lea.vmem [#allocation3], 8
  %406 = vst.msk [vmem:[%s405] sm:$0xff] %vm194, %v403
  %s407 = scalar_lea.vmem [#allocation2], 16
  %v408 = vld [vmem:[%s407] sm:$0xff]
  %v409 = vsel %vm194, %v403, 0
  %411 = vmatprep.subr.mxu0 0.0
  %412 = vmatpush1.msra.mxu0 0.0
  %413 = vmatprep.subr.mxu0 0.0
  %414 = vmatpush1.msra.mxu0 0.0
  %415 = vmatprep.subr.mxu0 0.0
  %416 = vmatpush1.msra.mxu0 0.0
  %417 = vmatprep.subr.mxu0 0.0
  %418 = vmatpush1.msra.mxu0 0.0
  %419 = vmatprep.subr.mxu0 0.0
  %420 = vmatpush1.msra.mxu0 0.0
  %421 = vmatprep.subr.mxu0 0.0
  %422 = vmatpush1.msra.mxu0 0.0
  %423 = vmatprep.subr.mxu0 0.0
  %424 = vmatpush1.msra.mxu0 0.0
  %425 = vmatprep.subr.mxu0 0.0
  %426 = vmatpush1.msra.mxu0 0.0
  %427 = vmatprep.subr.mxu0 0.0
  %428 = vmatpush1.msra.mxu0 0.0
  %429 = vmatprep.subr.mxu0 0.0
  %430 = vmatpush1.msra.mxu0 0.0
  %431 = vmatprep.subr.mxu0 0.0
  %432 = vmatpush1.msra.mxu0 0.0
  %433 = vmatprep.subr.mxu0 0.0
  %434 = vmatpush1.msra.mxu0 0.0
  %435 = vmatprep.subr.mxu0 0.0
  %436 = vmatpush1.msra.mxu0 %v190
  %437 = vmatprep.subr.mxu0 0.0
  %438 = vmatpush1.msra.mxu0 %v189
  %439 = vmatprep.subr.mxu0 0.0
  %440 = vmatpush1.msra.mxu0 %v188
  %441 = vmatprep.subr.mxu0 0.0
  %442 = vmatpush1.msra.mxu0 %v187
  %443 = vmatprep.subr.mxu0 0.0
  %444 = vmatpush2.msra.mxu0 0.0
  %445 = vmatprep.subr.mxu0 0.0
  %446 = vmatpush2.msra.mxu0 0.0
  %447 = vmatprep.subr.mxu0 0.0
  %448 = vmatpush2.msra.mxu0 0.0
  %449 = vmatprep.subr.mxu0 0.0
  %450 = vmatpush2.msra.mxu0 0.0
  %451 = vmatprep.subr.mxu0 0.0
  %452 = vmatpush2.msra.mxu0 0.0
  %453 = vmatprep.subr.mxu0 0.0
  %454 = vmatpush2.msra.mxu0 0.0
  %455 = vmatprep.subr.mxu0 0.0
  %456 = vmatpush2.msra.mxu0 0.0
  %457 = vmatprep.subr.mxu0 0.0
  %458 = vmatpush2.msra.mxu0 0.0
  %459 = vmatprep.subr.mxu0 0.0
  %460 = vmatpush2.msra.mxu0 0.0
  %461 = vmatprep.subr.mxu0 0.0
  %462 = vmatpush2.msra.mxu0 0.0
  %463 = vmatprep.subr.mxu0 0.0
  %464 = vmatpush2.msra.mxu0 0.0
  %465 = vmatprep.subr.mxu0 0.0
  %466 = vmatpush2.msra.mxu0 0.0
  %467 = vmatprep.subr.mxu0 0.0
  %468 = vmatpush2.msra.mxu0 0.0
  %469 = vmatprep.subr.mxu0 0.0
  %470 = vmatpush2.msra.mxu0 0.0
  %471 = vmatprep.subr.mxu0 0.0
  %472 = vmatpush2.msra.mxu0 0.0
  %473 = vmatprep.subr.mxu0 0.0
  %474 = vmatpush2.msra.mxu0 0.0
  %475 = vmatprep.mubr.f32.mxu0 0.0
  %476 = vmatmul.mubr.f32.gmra.mxu0 %v409
  %v477 = vpop.f32.mrf.mxu0
  %v478 = vadd.f32 0.0, %v477
  %v479 = vpop.f32.mrf.mxu0
  %480 = vdwg.mxu0
  %v481 = vadd.f32 %v408, %v478
  %v482 = vxor.u32 %v481, 2147483648
  %v483 = vmul.f32 %v482, 1.442695
  %v484 = vpow.pop %v483
  %v485 = vadd.f32 %v484, 1.0
  %v486 = vrcp.pop %v485
  %v487 = vmul.f32 1.0, %v486
  %v488 = vtanh.pop %v481
  %v489 = vmul.f32 %v487, %v394
  %491 = vrot.lane.b32.xlu0 %v488, 64
  %v492 = vpop.permute.xlu0 %491
  %v494 = vmul.f32 %v487, %v492
  %496 = vrot.lane.b32.xlu0 %v494, 32
  %v497 = vpop.permute.xlu0 %496
  %v499 = vadd.f32 %v489, %v497
  %v500 = vtanh.pop %v499
  %502 = vrot.lane.b32.xlu0 %v500, 64
  %v503 = vpop.permute.xlu0 %502
  %v505 = vmul.f32 %v487, %v503
  %507 = vrot.lane.b32.xlu0 %v505, 32
  %v508 = vpop.permute.xlu0 %507
  %s510 = scalar_lea.vmem [#allocation3], 16
  %511 = vst.msk [vmem:[%s510] sm:$0xff] %vm194, %v508
  %s512 = scalar_lea.vmem [#allocation2], 24
  %v513 = vld [vmem:[%s512] sm:$0xff]
  %v514 = vsel %vm194, %v508, 0
  %516 = vmatprep.subr.mxu0 0.0
  %517 = vmatpush1.msra.mxu0 0.0
  %518 = vmatprep.subr.mxu0 0.0
  %519 = vmatpush1.msra.mxu0 0.0
  %520 = vmatprep.subr.mxu0 0.0
  %521 = vmatpush1.msra.mxu0 0.0
  %522 = vmatprep.subr.mxu0 0.0
  %523 = vmatpush1.msra.mxu0 0.0
  %524 = vmatprep.subr.mxu0 0.0
  %525 = vmatpush1.msra.mxu0 0.0
  %526 = vmatprep.subr.mxu0 0.0
  %527 = vmatpush1.msra.mxu0 0.0
  %528 = vmatprep.subr.mxu0 0.0
  %529 = vmatpush1.msra.mxu0 0.0
  %530 = vmatprep.subr.mxu0 0.0
  %531 = vmatpush1.msra.mxu0 0.0
  %532 = vmatprep.subr.mxu0 0.0
  %533 = vmatpush1.msra.mxu0 0.0
  %534 = vmatprep.subr.mxu0 0.0
  %535 = vmatpush1.msra.mxu0 0.0
  %536 = vmatprep.subr.mxu0 0.0
  %537 = vmatpush1.msra.mxu0 0.0
  %538 = vmatprep.subr.mxu0 0.0
  %539 = vmatpush1.msra.mxu0 0.0
  %540 = vmatprep.subr.mxu0 0.0
  %541 = vmatpush1.msra.mxu0 %v190
  %542 = vmatprep.subr.mxu0 0.0
  %543 = vmatpush1.msra.mxu0 %v189
  %544 = vmatprep.subr.mxu0 0.0
  %545 = vmatpush1.msra.mxu0 %v188
  %546 = vmatprep.subr.mxu0 0.0
  %547 = vmatpush1.msra.mxu0 %v187
  %548 = vmatprep.subr.mxu0 0.0
  %549 = vmatpush2.msra.mxu0 0.0
  %550 = vmatprep.subr.mxu0 0.0
  %551 = vmatpush2.msra.mxu0 0.0
  %552 = vmatprep.subr.mxu0 0.0
  %553 = vmatpush2.msra.mxu0 0.0
  %554 = vmatprep.subr.mxu0 0.0
  %555 = vmatpush2.msra.mxu0 0.0
  %556 = vmatprep.subr.mxu0 0.0
  %557 = vmatpush2.msra.mxu0 0.0
  %558 = vmatprep.subr.mxu0 0.0
  %559 = vmatpush2.msra.mxu0 0.0
  %560 = vmatprep.subr.mxu0 0.0
  %561 = vmatpush2.msra.mxu0 0.0
  %562 = vmatprep.subr.mxu0 0.0
  %563 = vmatpush2.msra.mxu0 0.0
  %564 = vmatprep.subr.mxu0 0.0
  %565 = vmatpush2.msra.mxu0 0.0
  %566 = vmatprep.subr.mxu0 0.0
  %567 = vmatpush2.msra.mxu0 0.0
  %568 = vmatprep.subr.mxu0 0.0
  %569 = vmatpush2.msra.mxu0 0.0
  %570 = vmatprep.subr.mxu0 0.0
  %571 = vmatpush2.msra.mxu0 0.0
  %572 = vmatprep.subr.mxu0 0.0
  %573 = vmatpush2.msra.mxu0 0.0
  %574 = vmatprep.subr.mxu0 0.0
  %575 = vmatpush2.msra.mxu0 0.0
  %576 = vmatprep.subr.mxu0 0.0
  %577 = vmatpush2.msra.mxu0 0.0
  %578 = vmatprep.subr.mxu0 0.0
  %579 = vmatpush2.msra.mxu0 0.0
  %580 = vmatprep.mubr.f32.mxu0 0.0
  %581 = vmatmul.mubr.f32.gmra.mxu0 %v514
  %v582 = vpop.f32.mrf.mxu0
  %v583 = vadd.f32 0.0, %v582
  %v584 = vpop.f32.mrf.mxu0
  %585 = vdwg.mxu0
  %v586 = vadd.f32 %v513, %v583
  %v587 = vxor.u32 %v586, 2147483648
  %v588 = vmul.f32 %v587, 1.442695
  %v589 = vpow.pop %v588
  %v590 = vadd.f32 %v589, 1.0
  %v591 = vrcp.pop %v590
  %v592 = vmul.f32 1.0, %v591
  %v593 = vtanh.pop %v586
  %v594 = vmul.f32 %v592, %v499
  %596 = vrot.lane.b32.xlu0 %v593, 64
  %v597 = vpop.permute.xlu0 %596
  %v599 = vmul.f32 %v592, %v597
  %601 = vrot.lane.b32.xlu0 %v599, 32
  %v602 = vpop.permute.xlu0 %601
  %v604 = vadd.f32 %v594, %v602
  %v605 = vtanh.pop %v604
  %607 = vrot.lane.b32.xlu0 %v605, 64
  %v608 = vpop.permute.xlu0 %607
  %v610 = vmul.f32 %v592, %v608
  %612 = vrot.lane.b32.xlu0 %v610, 32
  %v613 = vpop.permute.xlu0 %612
  %s615 = scalar_lea.vmem [#allocation3], 24
  %616 = vst.msk [vmem:[%s615] sm:$0xff] %vm194, %v613
  %s617 = scalar_lea.vmem [#allocation2], 32
  %v618 = vld [vmem:[%s617] sm:$0xff]
  %v619 = vsel %vm194, %v613, 0
  %621 = vmatprep.subr.mxu0 0.0
  %622 = vmatpush1.msra.mxu0 0.0
  %623 = vmatprep.subr.mxu0 0.0
  %624 = vmatpush1.msra.mxu0 0.0
  %625 = vmatprep.subr.mxu0 0.0
  %626 = vmatpush1.msra.mxu0 0.0
  %627 = vmatprep.subr.mxu0 0.0
  %628 = vmatpush1.msra.mxu0 0.0
  %629 = vmatprep.subr.mxu0 0.0
  %630 = vmatpush1.msra.mxu0 0.0
  %631 = vmatprep.subr.mxu0 0.0
  %632 = vmatpush1.msra.mxu0 0.0
  %633 = vmatprep.subr.mxu0 0.0
  %634 = vmatpush1.msra.mxu0 0.0
  %635 = vmatprep.subr.mxu0 0.0
  %636 = vmatpush1.msra.mxu0 0.0
  %637 = vmatprep.subr.mxu0 0.0
  %638 = vmatpush1.msra.mxu0 0.0
  %639 = vmatprep.subr.mxu0 0.0
  %640 = vmatpush1.msra.mxu0 0.0
  %641 = vmatprep.subr.mxu0 0.0
  %642 = vmatpush1.msra.mxu0 0.0
  %643 = vmatprep.subr.mxu0 0.0
  %644 = vmatpush1.msra.mxu0 0.0
  %645 = vmatprep.subr.mxu0 0.0
  %646 = vmatpush1.msra.mxu0 %v190
  %647 = vmatprep.subr.mxu0 0.0
  %648 = vmatpush1.msra.mxu0 %v189
  %649 = vmatprep.subr.mxu0 0.0
  %650 = vmatpush1.msra.mxu0 %v188
  %651 = vmatprep.subr.mxu0 0.0
  %652 = vmatpush1.msra.mxu0 %v187
  %653 = vmatprep.subr.mxu0 0.0
  %654 = vmatpush2.msra.mxu0 0.0
  %655 = vmatprep.subr.mxu0 0.0
  %656 = vmatpush2.msra.mxu0 0.0
  %657 = vmatprep.subr.mxu0 0.0
  %658 = vmatpush2.msra.mxu0 0.0
  %659 = vmatprep.subr.mxu0 0.0
  %660 = vmatpush2.msra.mxu0 0.0
  %661 = vmatprep.subr.mxu0 0.0
  %662 = vmatpush2.msra.mxu0 0.0
  %663 = vmatprep.subr.mxu0 0.0
  %664 = vmatpush2.msra.mxu0 0.0
  %665 = vmatprep.subr.mxu0 0.0
  %666 = vmatpush2.msra.mxu0 0.0
  %667 = vmatprep.subr.mxu0 0.0
  %668 = vmatpush2.msra.mxu0 0.0
  %669 = vmatprep.subr.mxu0 0.0
  %670 = vmatpush2.msra.mxu0 0.0
  %671 = vmatprep.subr.mxu0 0.0
  %672 = vmatpush2.msra.mxu0 0.0
  %673 = vmatprep.subr.mxu0 0.0
  %674 = vmatpush2.msra.mxu0 0.0
  %675 = vmatprep.subr.mxu0 0.0
  %676 = vmatpush2.msra.mxu0 0.0
  %677 = vmatprep.subr.mxu0 0.0
  %678 = vmatpush2.msra.mxu0 0.0
  %679 = vmatprep.subr.mxu0 0.0
  %680 = vmatpush2.msra.mxu0 0.0
  %681 = vmatprep.subr.mxu0 0.0
  %682 = vmatpush2.msra.mxu0 0.0
  %683 = vmatprep.subr.mxu0 0.0
  %684 = vmatpush2.msra.mxu0 0.0
  %685 = vmatprep.mubr.f32.mxu0 0.0
  %686 = vmatmul.mubr.f32.gmra.mxu0 %v619
  %v687 = vpop.f32.mrf.mxu0
  %v688 = vadd.f32 0.0, %v687
  %v689 = vpop.f32.mrf.mxu0
  %690 = vdwg.mxu0
  %v691 = vadd.f32 %v618, %v688
  %v692 = vxor.u32 %v691, 2147483648
  %v693 = vmul.f32 %v692, 1.442695
  %v694 = vpow.pop %v693
  %v695 = vadd.f32 %v694, 1.0
  %v696 = vrcp.pop %v695
  %v697 = vmul.f32 1.0, %v696
  %v698 = vtanh.pop %v691
  %v699 = vmul.f32 %v697, %v604
  %701 = vrot.lane.b32.xlu0 %v698, 64
  %v702 = vpop.permute.xlu0 %701
  %v704 = vmul.f32 %v697, %v702
  %706 = vrot.lane.b32.xlu0 %v704, 32
  %v707 = vpop.permute.xlu0 %706
  %v709 = vadd.f32 %v699, %v707
  %v710 = vtanh.pop %v709
  %712 = vrot.lane.b32.xlu0 %v710, 64
  %v713 = vpop.permute.xlu0 %712
  %v715 = vmul.f32 %v697, %v713
  %717 = vrot.lane.b32.xlu0 %v715, 32
  %v718 = vpop.permute.xlu0 %717
  %s720 = scalar_lea.vmem [#allocation3], 32
  %721 = vst.msk [vmem:[%s720] sm:$0xff] %vm194, %v718
  %s722 = scalar_lea.vmem [#allocation2], 40
  %v723 = vld [vmem:[%s722] sm:$0xff]
  %v724 = vsel %vm194, %v718, 0
  %726 = vmatprep.subr.mxu0 0.0
  %727 = vmatpush1.msra.mxu0 0.0
  %728 = vmatprep.subr.mxu0 0.0
  %729 = vmatpush1.msra.mxu0 0.0
  %730 = vmatprep.subr.mxu0 0.0
  %731 = vmatpush1.msra.mxu0 0.0
  %732 = vmatprep.subr.mxu0 0.0
  %733 = vmatpush1.msra.mxu0 0.0
  %734 = vmatprep.subr.mxu0 0.0
  %735 = vmatpush1.msra.mxu0 0.0
  %736 = vmatprep.subr.mxu0 0.0
  %737 = vmatpush1.msra.mxu0 0.0
  %738 = vmatprep.subr.mxu0 0.0
  %739 = vmatpush1.msra.mxu0 0.0
  %740 = vmatprep.subr.mxu0 0.0
  %741 = vmatpush1.msra.mxu0 0.0
  %742 = vmatprep.subr.mxu0 0.0
  %743 = vmatpush1.msra.mxu0 0.0
  %744 = vmatprep.subr.mxu0 0.0
  %745 = vmatpush1.msra.mxu0 0.0
  %746 = vmatprep.subr.mxu0 0.0
  %747 = vmatpush1.msra.mxu0 0.0
  %748 = vmatprep.subr.mxu0 0.0
  %749 = vmatpush1.msra.mxu0 0.0
  %750 = vmatprep.subr.mxu0 0.0
  %751 = vmatpush1.msra.mxu0 %v190
  %752 = vmatprep.subr.mxu0 0.0
  %753 = vmatpush1.msra.mxu0 %v189
  %754 = vmatprep.subr.mxu0 0.0
  %755 = vmatpush1.msra.mxu0 %v188
  %756 = vmatprep.subr.mxu0 0.0
  %757 = vmatpush1.msra.mxu0 %v187
  %758 = vmatprep.subr.mxu0 0.0
  %759 = vmatpush2.msra.mxu0 0.0
  %760 = vmatprep.subr.mxu0 0.0
  %761 = vmatpush2.msra.mxu0 0.0
  %762 = vmatprep.subr.mxu0 0.0
  %763 = vmatpush2.msra.mxu0 0.0
  %764 = vmatprep.subr.mxu0 0.0
  %765 = vmatpush2.msra.mxu0 0.0
  %766 = vmatprep.subr.mxu0 0.0
  %767 = vmatpush2.msra.mxu0 0.0
  %768 = vmatprep.subr.mxu0 0.0
  %769 = vmatpush2.msra.mxu0 0.0
  %770 = vmatprep.subr.mxu0 0.0
  %771 = vmatpush2.msra.mxu0 0.0
  %772 = vmatprep.subr.mxu0 0.0
  %773 = vmatpush2.msra.mxu0 0.0
  %774 = vmatprep.subr.mxu0 0.0
  %775 = vmatpush2.msra.mxu0 0.0
  %776 = vmatprep.subr.mxu0 0.0
  %777 = vmatpush2.msra.mxu0 0.0
  %778 = vmatprep.subr.mxu0 0.0
  %779 = vmatpush2.msra.mxu0 0.0
  %780 = vmatprep.subr.mxu0 0.0
  %781 = vmatpush2.msra.mxu0 0.0
  %782 = vmatprep.subr.mxu0 0.0
  %783 = vmatpush2.msra.mxu0 0.0
  %784 = vmatprep.subr.mxu0 0.0
  %785 = vmatpush2.msra.mxu0 0.0
  %786 = vmatprep.subr.mxu0 0.0
  %787 = vmatpush2.msra.mxu0 0.0
  %788 = vmatprep.subr.mxu0 0.0
  %789 = vmatpush2.msra.mxu0 0.0
  %790 = vmatprep.mubr.f32.mxu0 0.0
  %791 = vmatmul.mubr.f32.gmra.mxu0 %v724
  %v792 = vpop.f32.mrf.mxu0
  %v793 = vadd.f32 0.0, %v792
  %v794 = vpop.f32.mrf.mxu0
  %795 = vdwg.mxu0
  %v796 = vadd.f32 %v723, %v793
  %v797 = vxor.u32 %v796, 2147483648
  %v798 = vmul.f32 %v797, 1.442695
  %v799 = vpow.pop %v798
  %v800 = vadd.f32 %v799, 1.0
  %v801 = vrcp.pop %v800
  %v802 = vmul.f32 1.0, %v801
  %v803 = vtanh.pop %v796
  %v804 = vmul.f32 %v802, %v709
  %806 = vrot.lane.b32.xlu0 %v803, 64
  %v807 = vpop.permute.xlu0 %806
  %v809 = vmul.f32 %v802, %v807
  %811 = vrot.lane.b32.xlu0 %v809, 32
  %v812 = vpop.permute.xlu0 %811
  %v814 = vadd.f32 %v804, %v812
  %v815 = vtanh.pop %v814
  %817 = vrot.lane.b32.xlu0 %v815, 64
  %v818 = vpop.permute.xlu0 %817
  %v820 = vmul.f32 %v802, %v818
  %822 = vrot.lane.b32.xlu0 %v820, 32
  %v823 = vpop.permute.xlu0 %822
  %s825 = scalar_lea.vmem [#allocation3], 40
  %826 = vst.msk [vmem:[%s825] sm:$0xff] %vm194, %v823
  %s827 = scalar_lea.vmem [#allocation2], 48
  %v828 = vld [vmem:[%s827] sm:$0xff]
  %v829 = vsel %vm194, %v823, 0
  %831 = vmatprep.subr.mxu0 0.0
  %832 = vmatpush1.msra.mxu0 0.0
  %833 = vmatprep.subr.mxu0 0.0
  %834 = vmatpush1.msra.mxu0 0.0
  %835 = vmatprep.subr.mxu0 0.0
  %836 = vmatpush1.msra.mxu0 0.0
  %837 = vmatprep.subr.mxu0 0.0
  %838 = vmatpush1.msra.mxu0 0.0
  %839 = vmatprep.subr.mxu0 0.0
  %840 = vmatpush1.msra.mxu0 0.0
  %841 = vmatprep.subr.mxu0 0.0
  %842 = vmatpush1.msra.mxu0 0.0
  %843 = vmatprep.subr.mxu0 0.0
  %844 = vmatpush1.msra.mxu0 0.0
  %845 = vmatprep.subr.mxu0 0.0
  %846 = vmatpush1.msra.mxu0 0.0
  %847 = vmatprep.subr.mxu0 0.0
  %848 = vmatpush1.msra.mxu0 0.0
  %849 = vmatprep.subr.mxu0 0.0
  %850 = vmatpush1.msra.mxu0 0.0
  %851 = vmatprep.subr.mxu0 0.0
  %852 = vmatpush1.msra.mxu0 0.0
  %853 = vmatprep.subr.mxu0 0.0
  %854 = vmatpush1.msra.mxu0 0.0
  %855 = vmatprep.subr.mxu0 0.0
  %856 = vmatpush1.msra.mxu0 %v190
  %857 = vmatprep.subr.mxu0 0.0
  %858 = vmatpush1.msra.mxu0 %v189
  %859 = vmatprep.subr.mxu0 0.0
  %860 = vmatpush1.msra.mxu0 %v188
  %861 = vmatprep.subr.mxu0 0.0
  %862 = vmatpush1.msra.mxu0 %v187
  %863 = vmatprep.subr.mxu0 0.0
  %864 = vmatpush2.msra.mxu0 0.0
  %865 = vmatprep.subr.mxu0 0.0
  %866 = vmatpush2.msra.mxu0 0.0
  %867 = vmatprep.subr.mxu0 0.0
  %868 = vmatpush2.msra.mxu0 0.0
  %869 = vmatprep.subr.mxu0 0.0
  %870 = vmatpush2.msra.mxu0 0.0
  %871 = vmatprep.subr.mxu0 0.0
  %872 = vmatpush2.msra.mxu0 0.0
  %873 = vmatprep.subr.mxu0 0.0
  %874 = vmatpush2.msra.mxu0 0.0
  %875 = vmatprep.subr.mxu0 0.0
  %876 = vmatpush2.msra.mxu0 0.0
  %877 = vmatprep.subr.mxu0 0.0
  %878 = vmatpush2.msra.mxu0 0.0
  %879 = vmatprep.subr.mxu0 0.0
  %880 = vmatpush2.msra.mxu0 0.0
  %881 = vmatprep.subr.mxu0 0.0
  %882 = vmatpush2.msra.mxu0 0.0
  %883 = vmatprep.subr.mxu0 0.0
  %884 = vmatpush2.msra.mxu0 0.0
  %885 = vmatprep.subr.mxu0 0.0
  %886 = vmatpush2.msra.mxu0 0.0
  %887 = vmatprep.subr.mxu0 0.0
  %888 = vmatpush2.msra.mxu0 0.0
  %889 = vmatprep.subr.mxu0 0.0
  %890 = vmatpush2.msra.mxu0 0.0
  %891 = vmatprep.subr.mxu0 0.0
  %892 = vmatpush2.msra.mxu0 0.0
  %893 = vmatprep.subr.mxu0 0.0
  %894 = vmatpush2.msra.mxu0 0.0
  %895 = vmatprep.mubr.f32.mxu0 0.0
  %896 = vmatmul.mubr.f32.gmra.mxu0 %v829
  %v897 = vpop.f32.mrf.mxu0
  %v898 = vadd.f32 0.0, %v897
  %v899 = vpop.f32.mrf.mxu0
  %900 = vdwg.mxu0
  %v901 = vadd.f32 %v828, %v898
  %v902 = vxor.u32 %v901, 2147483648
  %v903 = vmul.f32 %v902, 1.442695
  %v904 = vpow.pop %v903
  %v905 = vadd.f32 %v904, 1.0
  %v906 = vrcp.pop %v905
  %v907 = vmul.f32 1.0, %v906
  %v908 = vtanh.pop %v901
  %v909 = vmul.f32 %v907, %v814
  %911 = vrot.lane.b32.xlu0 %v908, 64
  %v912 = vpop.permute.xlu0 %911
  %v914 = vmul.f32 %v907, %v912
  %916 = vrot.lane.b32.xlu0 %v914, 32
  %v917 = vpop.permute.xlu0 %916
  %v919 = vadd.f32 %v909, %v917
  %v920 = vtanh.pop %v919
  %922 = vrot.lane.b32.xlu0 %v920, 64
  %v923 = vpop.permute.xlu0 %922
  %v925 = vmul.f32 %v907, %v923
  %927 = vrot.lane.b32.xlu0 %v925, 32
  %v928 = vpop.permute.xlu0 %927
  %s930 = scalar_lea.vmem [#allocation3], 48
  %931 = vst.msk [vmem:[%s930] sm:$0xff] %vm194, %v928
  %s932 = scalar_lea.vmem [#allocation2], 56
  %v933 = vld [vmem:[%s932] sm:$0xff]
  %v934 = vsel %vm194, %v928, 0
  %936 = vmatprep.subr.mxu0 0.0
  %937 = vmatpush1.msra.mxu0 0.0
  %938 = vmatprep.subr.mxu0 0.0
  %939 = vmatpush1.msra.mxu0 0.0
  %940 = vmatprep.subr.mxu0 0.0
  %941 = vmatpush1.msra.mxu0 0.0
  %942 = vmatprep.subr.mxu0 0.0
  %943 = vmatpush1.msra.mxu0 0.0
  %944 = vmatprep.subr.mxu0 0.0
  %945 = vmatpush1.msra.mxu0 0.0
  %946 = vmatprep.subr.mxu0 0.0
  %947 = vmatpush1.msra.mxu0 0.0
  %948 = vmatprep.subr.mxu0 0.0
  %949 = vmatpush1.msra.mxu0 0.0
  %950 = vmatprep.subr.mxu0 0.0
  %951 = vmatpush1.msra.mxu0 0.0
  %952 = vmatprep.subr.mxu0 0.0
  %953 = vmatpush1.msra.mxu0 0.0
  %954 = vmatprep.subr.mxu0 0.0
  %955 = vmatpush1.msra.mxu0 0.0
  %956 = vmatprep.subr.mxu0 0.0
  %957 = vmatpush1.msra.mxu0 0.0
  %958 = vmatprep.subr.mxu0 0.0
  %959 = vmatpush1.msra.mxu0 0.0
  %960 = vmatprep.subr.mxu0 0.0
  %961 = vmatpush1.msra.mxu0 %v190
  %962 = vmatprep.subr.mxu0 0.0
  %963 = vmatpush1.msra.mxu0 %v189
  %964 = vmatprep.subr.mxu0 0.0
  %965 = vmatpush1.msra.mxu0 %v188
  %966 = vmatprep.subr.mxu0 0.0
  %967 = vmatpush1.msra.mxu0 %v187
  %968 = vmatprep.subr.mxu0 0.0
  %969 = vmatpush2.msra.mxu0 0.0
  %970 = vmatprep.subr.mxu0 0.0
  %971 = vmatpush2.msra.mxu0 0.0
  %972 = vmatprep.subr.mxu0 0.0
  %973 = vmatpush2.msra.mxu0 0.0
  %974 = vmatprep.subr.mxu0 0.0
  %975 = vmatpush2.msra.mxu0 0.0
  %976 = vmatprep.subr.mxu0 0.0
  %977 = vmatpush2.msra.mxu0 0.0
  %978 = vmatprep.subr.mxu0 0.0
  %979 = vmatpush2.msra.mxu0 0.0
  %980 = vmatprep.subr.mxu0 0.0
  %981 = vmatpush2.msra.mxu0 0.0
  %982 = vmatprep.subr.mxu0 0.0
  %983 = vmatpush2.msra.mxu0 0.0
  %984 = vmatprep.subr.mxu0 0.0
  %985 = vmatpush2.msra.mxu0 0.0
  %986 = vmatprep.subr.mxu0 0.0
  %987 = vmatpush2.msra.mxu0 0.0
  %988 = vmatprep.subr.mxu0 0.0
  %989 = vmatpush2.msra.mxu0 0.0
  %990 = vmatprep.subr.mxu0 0.0
  %991 = vmatpush2.msra.mxu0 0.0
  %992 = vmatprep.subr.mxu0 0.0
  %993 = vmatpush2.msra.mxu0 0.0
  %994 = vmatprep.subr.mxu0 0.0
  %995 = vmatpush2.msra.mxu0 0.0
  %996 = vmatprep.subr.mxu0 0.0
  %997 = vmatpush2.msra.mxu0 0.0
  %998 = vmatprep.subr.mxu0 0.0
  %999 = vmatpush2.msra.mxu0 0.0
  %1000 = vmatprep.mubr.f32.mxu0 0.0
  %1001 = vmatmul.mubr.f32.gmra.mxu0 %v934
  %v1002 = vpop.f32.mrf.mxu0
  %v1003 = vadd.f32 0.0, %v1002
  %v1004 = vpop.f32.mrf.mxu0
  %1005 = vdwg.mxu0
  %v1006 = vadd.f32 %v933, %v1003
  %v1007 = vxor.u32 %v1006, 2147483648
  %v1008 = vmul.f32 %v1007, 1.442695
  %v1009 = vpow.pop %v1008
  %v1010 = vadd.f32 %v1009, 1.0
  %v1011 = vrcp.pop %v1010
  %v1012 = vmul.f32 1.0, %v1011
  %v1013 = vtanh.pop %v1006
  %v1014 = vmul.f32 %v1012, %v919
  %1016 = vrot.lane.b32.xlu0 %v1013, 64
  %v1017 = vpop.permute.xlu0 %1016
  %v1019 = vmul.f32 %v1012, %v1017
  %1021 = vrot.lane.b32.xlu0 %v1019, 32
  %v1022 = vpop.permute.xlu0 %1021
  %v1024 = vadd.f32 %v1014, %v1022
  %v1025 = vtanh.pop %v1024
  %1027 = vrot.lane.b32.xlu0 %v1025, 64
  %v1028 = vpop.permute.xlu0 %1027
  %v1030 = vmul.f32 %v1012, %v1028
  %1032 = vrot.lane.b32.xlu0 %v1030, 32
  %v1033 = vpop.permute.xlu0 %1032
  %s1035 = scalar_lea.vmem [#allocation3], 56
  %1036 = vst.msk [vmem:[%s1035] sm:$0xff] %vm194, %v1033
  %1037 = vst.msk [vmem:[%s9] sm:$0xff] %vm194, %v1033
  %1039 = vrot.lane.b32.xlu0 %v1024, 96
  %v1040 = vpop.permute.xlu0 %1039
  %1042 = vst.msk [vmem:[%s10] sm:$0xff] %vm194, %v1040
  %v1043 = vld [vmem:[#allocation3] sm:$0xff]
  %v1044 = vld [vmem:[#allocation3 + $0x8] sm:$0xff]
  %v1045 = vld [vmem:[#allocation3 + $0x10] sm:$0xff]
  %v1046 = vld [vmem:[#allocation3 + $0x18] sm:$0xff]
  %v1047 = vld [vmem:[#allocation3 + $0x20] sm:$0xff]
  %v1048 = vld [vmem:[#allocation3 + $0x28] sm:$0xff]
  %v1049 = vld [vmem:[#allocation3 + $0x30] sm:$0xff]
  %v1050 = vld [vmem:[#allocation3 + $0x38] sm:$0xff]
  %v1051 = vld [vmem:[%s6] sm:$0xff]
  %v1052 = vld [vmem:[%s6 + $0x8] sm:$0xff]
  %v1053 = vld [vmem:[%s6 + $0x10] sm:$0xff]
  %v1054 = vld [vmem:[%s6 + $0x18] sm:$0xff]
  %v1055 = vld [vmem:[%s7] sm:$0x1]
  %v1057 = vlaneseq
  %v1058 = vshrl.u32 %v1057, 7
  %v1059 = vsub.s32 0, %v1058
  %v1060 = vrot.slane %v1055, %v1059
  %v1063 = vsel %vm194, %v1043, 0
  %v1066 = vsel %vm194, %v1044, 0
  %v1069 = vsel %vm194, %v1045, 0
  %v1072 = vsel %vm194, %v1046, 0
  %v1075 = vsel %vm194, %v1047, 0
  %v1078 = vsel %vm194, %v1048, 0
  %v1081 = vsel %vm194, %v1049, 0
  %v1084 = vsel %vm194, %v1050, 0
  %1086 = vmatprep.subr.mxu0 0.0
  %1087 = vmatpush1.msra.mxu0 0.0
  %1088 = vmatprep.subr.mxu0 0.0
  %1089 = vmatpush1.msra.mxu0 0.0
  %1090 = vmatprep.subr.mxu0 0.0
  %1091 = vmatpush1.msra.mxu0 0.0
  %1092 = vmatprep.subr.mxu0 0.0
  %1093 = vmatpush1.msra.mxu0 0.0
  %1094 = vmatprep.subr.mxu0 0.0
  %1095 = vmatpush1.msra.mxu0 0.0
  %1096 = vmatprep.subr.mxu0 0.0
  %1097 = vmatpush1.msra.mxu0 0.0
  %1098 = vmatprep.subr.mxu0 0.0
  %1099 = vmatpush1.msra.mxu0 0.0
  %1100 = vmatprep.subr.mxu0 0.0
  %1101 = vmatpush1.msra.mxu0 0.0
  %1102 = vmatprep.subr.mxu0 0.0
  %1103 = vmatpush1.msra.mxu0 0.0
  %1104 = vmatprep.subr.mxu0 0.0
  %1105 = vmatpush1.msra.mxu0 0.0
  %1106 = vmatprep.subr.mxu0 0.0
  %1107 = vmatpush1.msra.mxu0 0.0
  %1108 = vmatprep.subr.mxu0 0.0
  %1109 = vmatpush1.msra.mxu0 0.0
  %1110 = vmatprep.subr.mxu0 0.0
  %1111 = vmatpush1.msra.mxu0 %v1054
  %1112 = vmatprep.subr.mxu0 0.0
  %1113 = vmatpush1.msra.mxu0 %v1053
  %1114 = vmatprep.subr.mxu0 0.0
  %1115 = vmatpush1.msra.mxu0 %v1052
  %1116 = vmatprep.subr.mxu0 0.0
  %1117 = vmatpush1.msra.mxu0 %v1051
  %1118 = vmatprep.subr.mxu0 0.0
  %1119 = vmatpush2.msra.mxu0 0.0
  %1120 = vmatprep.subr.mxu0 0.0
  %1121 = vmatpush2.msra.mxu0 0.0
  %1122 = vmatprep.subr.mxu0 0.0
  %1123 = vmatpush2.msra.mxu0 0.0
  %1124 = vmatprep.subr.mxu0 0.0
  %1125 = vmatpush2.msra.mxu0 0.0
  %1126 = vmatprep.subr.mxu0 0.0
  %1127 = vmatpush2.msra.mxu0 0.0
  %1128 = vmatprep.subr.mxu0 0.0
  %1129 = vmatpush2.msra.mxu0 0.0
  %1130 = vmatprep.subr.mxu0 0.0
  %1131 = vmatpush2.msra.mxu0 0.0
  %1132 = vmatprep.subr.mxu0 0.0
  %1133 = vmatpush2.msra.mxu0 0.0
  %1134 = vmatprep.subr.mxu0 0.0
  %1135 = vmatpush2.msra.mxu0 0.0
  %1136 = vmatprep.subr.mxu0 0.0
  %1137 = vmatpush2.msra.mxu0 0.0
  %1138 = vmatprep.subr.mxu0 0.0
  %1139 = vmatpush2.msra.mxu0 0.0
  %1140 = vmatprep.subr.mxu0 0.0
  %1141 = vmatpush2.msra.mxu0 0.0
  %1142 = vmatprep.subr.mxu0 0.0
  %1143 = vmatpush2.msra.mxu0 0.0
  %1144 = vmatprep.subr.mxu0 0.0
  %1145 = vmatpush2.msra.mxu0 0.0
  %1146 = vmatprep.subr.mxu0 0.0
  %1147 = vmatpush2.msra.mxu0 0.0
  %1148 = vmatprep.subr.mxu0 0.0
  %1149 = vmatpush2.msra.mxu0 0.0
  %1150 = vmatprep.mubr.f32.mxu0 0.0
  %1151 = vmatmul.mubr.f32.gmra.mxu0 %v1063
  %v1152 = vpop.f32.mrf.mxu0
  %v1153 = vadd.f32 %v1060, %v1152
  %v1154 = vpop.f32.mrf.mxu0
  %1155 = vmatprep.mubr.f32.mxu0 0.0
  %1156 = vmatmul.mubr.f32.gmra.mxu0 %v1066
  %v1157 = vpop.f32.mrf.mxu0
  %v1158 = vadd.f32 %v1060, %v1157
  %v1159 = vpop.f32.mrf.mxu0
  %1160 = vmatprep.mubr.f32.mxu0 0.0
  %1161 = vmatmul.mubr.f32.gmra.mxu0 %v1069
  %v1162 = vpop.f32.mrf.mxu0
  %v1163 = vadd.f32 %v1060, %v1162
  %v1164 = vpop.f32.mrf.mxu0
  %1165 = vmatprep.mubr.f32.mxu0 0.0
  %1166 = vmatmul.mubr.f32.gmra.mxu0 %v1072
  %v1167 = vpop.f32.mrf.mxu0
  %v1168 = vadd.f32 %v1060, %v1167
  %v1169 = vpop.f32.mrf.mxu0
  %1170 = vmatprep.mubr.f32.mxu0 0.0
  %1171 = vmatmul.mubr.f32.gmra.mxu0 %v1075
  %v1172 = vpop.f32.mrf.mxu0
  %v1173 = vadd.f32 %v1060, %v1172
  %v1174 = vpop.f32.mrf.mxu0
  %1175 = vmatprep.mubr.f32.mxu0 0.0
  %1176 = vmatmul.mubr.f32.gmra.mxu0 %v1078
  %v1177 = vpop.f32.mrf.mxu0
  %v1178 = vadd.f32 %v1060, %v1177
  %v1179 = vpop.f32.mrf.mxu0
  %1180 = vmatprep.mubr.f32.mxu0 0.0
  %1181 = vmatmul.mubr.f32.gmra.mxu0 %v1081
  %v1182 = vpop.f32.mrf.mxu0
  %v1183 = vadd.f32 %v1060, %v1182
  %v1184 = vpop.f32.mrf.mxu0
  %1185 = vmatprep.mubr.f32.mxu0 0.0
  %1186 = vmatmul.mubr.f32.gmra.mxu0 %v1084
  %v1187 = vpop.f32.mrf.mxu0
  %v1188 = vadd.f32 %v1060, %v1187
  %v1189 = vpop.f32.mrf.mxu0
  %1190 = vdwg.mxu0
  %1191 = vst.msk [vmem:[%s8] sm:$0xff] %vm49, %v1153
  %1192 = vst.msk [vmem:[%s8 + $0x8] sm:$0xff] %vm49, %v1158
  %1193 = vst.msk [vmem:[%s8 + $0x10] sm:$0xff] %vm49, %v1163
  %1194 = vst.msk [vmem:[%s8 + $0x18] sm:$0xff] %vm49, %v1168
  %1195 = vst.msk [vmem:[%s8 + $0x20] sm:$0xff] %vm49, %v1173
  %1196 = vst.msk [vmem:[%s8 + $0x28] sm:$0xff] %vm49, %v1178
  %1197 = vst.msk [vmem:[%s8 + $0x30] sm:$0xff] %vm49, %v1183
  %1198 = vst.msk [vmem:[%s8 + $0x38] sm:$0xff] %vm49, %v1188
  // Predicated region
  $region34: #{identity_generator_forward.1} parent=0 // pred_check
    _
  $region35: #{identity_generator_forward.1} parent=0 // pred_check_branch
    %1200 = sbr.rel (0) target = $region37
  $region36: #{identity_generator_forward.1} parent=0 // pred_region
    _
  $region37: #{identity_generator_forward.1} parent=0 // pred_fallthru
    _
  // Predicated region
  $region38: #{identity_generator_forward.1} parent=0 // pred_check
    _
  $region39: #{identity_generator_forward.1} parent=0 // pred_check_branch
    %1202 = sbr.rel (0) target = $region41
  $region40: #{identity_generator_forward.1} parent=0 // pred_region
    _
  $region41: #{identity_generator_forward.1} parent=0 // pred_fallthru
    _
  // Predicated region
  $region42: #{identity_generator_forward.1} parent=0 // pred_check
    _
  $region43: #{identity_generator_forward.1} parent=0 // pred_check_branch
    %1204 = sbr.rel (0) target = $region45
  $region44: #{identity_generator_forward.1} parent=0 // pred_region
    _
  $region45: #{identity_generator_forward.1} parent=0 // pred_fallthru
    _
  // Predicated region
  $region46: #{identity_generator_forward.1} parent=0 // pred_check
    _
  $region47: #{identity_generator_forward.1} parent=0 // pred_check_branch
    %1206 = sbr.rel (0) target = $region49
  $region48: #{identity_generator_forward.1} parent=0 // pred_region
    _
  $region49: #{identity_generator_forward.1} parent=0 // pred_fallthru
    _
  // Predicated region
  $region50: #{identity_generator_forward.1} parent=0 // pred_check
    _
  $region51: #{identity_generator_forward.1} parent=0 // pred_check_branch
    %1208 = sbr.rel (0) target = $region53
  $region52: #{identity_generator_forward.1} parent=0 // pred_region
    _
  $region53: #{identity_generator_forward.1} parent=0 // pred_fallthru
    _
  // Predicated region
  $region54: #{identity_generator_forward.1} parent=0 // pred_check
    _
  $region55: #{identity_generator_forward.1} parent=0 // pred_check_branch
    %1210 = sbr.rel (0) target = $region57
  $region56: #{identity_generator_forward.1} parent=0 // pred_region
    _
  $region57: #{identity_generator_forward.1} parent=0 // pred_fallthru
    _

</llo_original>
